<compile_context>
chip_gen: v7x
topology: tpu7x:2x2x1
jax: 0.10.0
libtpu: 0.0.40
codegen_flags: <defaults>
</compile_context>

<pallas_src>
import functools
import math

import jax
import jax.numpy as jnp
from jax.experimental import pallas as pl
from jax.experimental.pallas import tpu as pltpu

# ---- module defaults (from CellTypeNet / InstNrm __init__) -----------------
MIN_POS = 100000.0
MIN_SGNL = 50000.0
MAX_SGNL = 250000.0
SCALE = 15000.0               # used as log(scale), like torch.tensor(scale).log()
MXPR = 90000.0
_INV_LOG_SCALE = 1.0 / math.log(SCALE)


def _round_up(v, m):
    return ((v + m - 1) // m) * m


def cell_type_net_kernel(x_ref, noise_ref, prx_ref, w1_ref, b1_ref, w2_ref,
                         b2_ref, out_ref, part_ref, *, n_valid):
    """One N-tile of the forward pass (cells on lanes, n_bit on sublanes).

    x_ref     (T, G)       gene counts (natural layout; contracted over G)
    noise_ref (B, T)       pre-sampled Poisson noise, transposed
    prx_ref   (B, G)       probe matrix transposed (hoisted exp/normalize)
    w1/b1     (M, B),(M,1)  rcn layer 1, transposed
    w2/b2     (S, M),(S,1)  rcn layer 2, transposed
    out_ref   (S+B, T)     fused lane-dense slab: rows 0:S xrcn^T, S:S+B emb^T
    part_ref  (1, 8, 128)  per-tile partial sums:
        sublane 0: sum((min_sgnl - prj).clamp(0)^2)     over valid cells
        sublane 1: sum((prj - max_sgnl).clamp(0)^2)     over valid cells
        sublane 2: sum over top-half of ((min_pos - (prj+noise)).clamp(0)^2)
    """
    noise = noise_ref[...]                                  # (B, T)
    nb, t = noise.shape
    k = nb // 2

    # prj^T = prx^T @ x^T : contract the gene axis, result lands directly in
    # the transposed (B, T) layout (no in-kernel transpose of x needed).
    prj = jax.lax.dot_general(
        prx_ref[...], x_ref[...],
        dimension_numbers=(((1,), (1,)), ((), ())),
        preferred_element_type=jnp.float32)                 # (B, T)

    # ---- InstNrm -----------------------------------------------------------
    pn = prj + noise
    # TODO(synk): matches torch exactly incl. log(0) = -inf for a fully-zero row.
    x1 = jnp.log(pn)

    # cnt[c, r] = #{j : x1[j, r] < x1[c, r]}  (replaces torch.sort; no
    # tie-break needed because everything below depends only on values).
    # x1[j:j+1, :] is a sublane slice -> cheap sublane broadcast per iteration.
    cnt = jnp.zeros(x1.shape, jnp.float32)
    for j in range(nb):                     # nb is small & static -> unrolled
        cnt = cnt + (x1[j:j + 1, :] < x1).astype(jnp.float32)

    neg = jnp.float32(-3.0e38)
    mask_km1 = cnt <= float(k - 1)          # {c : x1[c] <= o[k-1]}
    mask_k = cnt <= float(k)                # {c : x1[c] <= o[k]}
    o_km1 = jnp.max(jnp.where(mask_km1, x1, neg), axis=0, keepdims=True)
    o_k = jnp.max(jnp.where(mask_k, x1, neg), axis=0, keepdims=True)
    l = 0.5 * (o_km1 + o_k)                                 # (1, T)

    emb = jnp.tanh((x1 - l) * _INV_LOG_SCALE)               # (B, T)

    # ---- rcn: Linear -> ReLU -> Linear -> ReLU (transposed layout) ---------
    h = jnp.maximum(
        jnp.dot(w1_ref[...], emb, preferred_element_type=jnp.float32)
        + b1_ref[...], 0.0)                                 # (M, T)
    xrcn = jnp.maximum(
        jnp.dot(w2_ref[...], h, preferred_element_type=jnp.float32)
        + b2_ref[...], 0.0)                                 # (S, T)

    # single fused lane-dense output slab (unmasked lane-wise stores)
    out_ref[...] = jnp.concatenate([xrcn, emb], axis=0)     # (S+B, T)

    # ---- margin loss: per-tile partial sums (reduced in the wrapper) -------
    cols = (jax.lax.broadcasted_iota(jnp.int32, (1, t), 1)
            + pl.program_id(0) * t)
    valid = (cols < n_valid).astype(jnp.float32)            # (1, T)

    lower_sum = jnp.sum(jnp.maximum(MIN_SGNL - prj, 0.0) ** 2 * valid)
    upper_sum = jnp.sum(jnp.maximum(prj - MAX_SGNL, 0.0) ** 2 * valid)

    # median term: sum over the top (nb - k) values of (prj + noise) per cell
    # (== b.exp() in the original; exact incl. ties since it's value-only).
    pn_k = jnp.max(jnp.where(mask_k, pn, -1.0), axis=0, keepdims=True)  # exp(o_k)
    g = jnp.maximum(MIN_POS - pn, 0.0) ** 2                             # (B, T)
    gt = (x1 > o_k).astype(jnp.float32)
    n_gt = jnp.sum(gt, axis=0, keepdims=True)
    g_k = jnp.maximum(MIN_POS - pn_k, 0.0) ** 2
    med = jnp.sum(g * gt, axis=0, keepdims=True) + (float(nb - k) - n_gt) * g_k
    median_sum = jnp.sum(med * valid)

    sub = jax.lax.broadcasted_iota(jnp.int32, (8, 128), 0)
    part_ref[0] = jnp.where(sub == 0, lower_sum,
                  jnp.where(sub == 1, upper_sum,
                  jnp.where(sub == 2, median_sum, 0.0)))


def cell_type_net_forward(x, noise, enc_w, w1, b1, w2, b2, *, tile_n=4096):
    """CellTypeNet.forward (rnd=False, dropout p=0): returns (Xrcn, emb, mrgn).

    tile_n: cells per grid step (multiple of 128).  4096 (~6 MiB double
    buffered) is safe on v7x's 64 MiB VMEM; on v5e/v6e (128 MiB VMEM) it can
    be raised to 8192-16384.  tile_n is capped so at least two tiles exist
    when possible (v7x megacore under dimension_semantics=("parallel",)).
    """
    n, g = x.shape
    b = enc_w.shape[1]
    m = w1.shape[1]
    s = w2.shape[1]
    k = b // 2

    # keep >= 2 tiles when possible; lane-dim blocks require tile_n % 128 == 0
    tile_n = max(128, min(tile_n, _round_up(pl.cdiv(n, 2), 128)))
    assert tile_n % 128 == 0
    num_tiles = pl.cdiv(n, tile_n)
    n_pad = num_tiles * tile_n

    # Hoisted: prx depends only on the encoder weights (get_emb, rnd=False).
    # TODO(synk): rnd=True (prx.round()) and Dropout(p>0) branches not exercised
    # (module defaults make them identity).
    wts = jnp.exp(enc_w)
    prx_t = (wts / jnp.sum(wts) * MXPR).T                    # (B, G)
    w1_t, b1_t = w1.T, b1.T                                  # (M, B), (M, 1)
    w2_t, b2_t = w2.T, b2.T                                  # (S, M), (S, 1)

    x_p = jnp.pad(x, ((0, n_pad - n), (0, 0)))               # (n_pad, G)
    noise_t = jnp.pad(noise, ((0, n_pad - n), (0, 0))).T     # (B, n_pad)

    flops = 2 * n_pad * (g * b + b * m + m * s) + 3 * n_pad * b * b
    transcendentals = 2 * n_pad * b
    bytes_accessed = 4 * (n_pad * (g + b)                 # x + noise^T in
                          + n_pad * (s + b)               # fused output slab
                          + g * b + b * m + m + m * s + s
                          + num_tiles * 8 * 128)

    out_slab, partials = pl.pallas_call(
        functools.partial(cell_type_net_kernel, n_valid=n),
        grid=(num_tiles,),
        in_specs=[pl.BlockSpec((tile_n, g), lambda i: (i, 0)),   # x
                  pl.BlockSpec((b, tile_n), lambda i: (0, i)),   # noise^T
                  pl.BlockSpec((b, g), lambda i: (0, 0)),        # prx^T
                  pl.BlockSpec((m, b), lambda i: (0, 0)),        # w1^T
                  pl.BlockSpec((m, 1), lambda i: (0, 0)),        # b1^T
                  pl.BlockSpec((s, m), lambda i: (0, 0)),        # w2^T
                  pl.BlockSpec((s, 1), lambda i: (0, 0))],       # b2^T
        out_specs=(pl.BlockSpec((s + b, tile_n), lambda i: (0, i)),
                   pl.BlockSpec((1, 8, 128), lambda i: (i, 0, 0))),
        out_shape=(jax.ShapeDtypeStruct((s + b, n_pad), jnp.float32),
                   jax.ShapeDtypeStruct((num_tiles, 8, 128), jnp.float32)),
        compiler_params=pltpu.CompilerParams(
            dimension_semantics=("parallel",),
            vmem_limit_bytes=48 * 1024 * 1024),
        cost_estimate=pl.CostEstimate(
            flops=flops, transcendentals=transcendentals,
            bytes_accessed=bytes_accessed),
    )(x_p, noise_t, prx_t, w1_t, b1_t, w2_t, b2_t)

    # Padded columns (cells >= n) contain NaN (log(0) rows) in the slab; they
    # are sliced off here and masked out of the loss, never consume them.
    xrcn = out_slab[:s, :n].T
    emb = out_slab[s:, :n].T

    # reconstruct the three means from the per-tile partial sums
    lower = jnp.sum(partials[:, 0, 0]) / (n * b)
    upper = jnp.sum(partials[:, 1, 0]) / (n * b)
    median = jnp.sum(partials[:, 2, 0]) / (n * (b - k))
    mrgn = lower + upper + median
    return xrcn, emb, mrgn


def reference_forward(x, noise, enc_w, w1, b1, w2, b2):
    """Pure-JAX reference (mirrors the PyTorch module literally)."""
    hp = jax.lax.Precision.HIGHEST
    wts = jnp.exp(enc_w)
    prx = wts / jnp.sum(wts) * MXPR
    prj = jnp.dot(x, prx, precision=hp)
    x1 = jnp.log(prj + noise)
    o = jnp.sort(x1, axis=1)
    k = x1.shape[1] // 2
    a, bb = o[:, :k], o[:, k:]
    l = (a[:, -1:] + bb[:, :1]) / 2
    lower = jnp.mean(jnp.maximum(MIN_SGNL - prj, 0.0) ** 2)
    upper = jnp.mean(jnp.maximum(prj - MAX_SGNL, 0.0) ** 2)
    median = jnp.mean(jnp.maximum(MIN_POS - jnp.exp(bb), 0.0) ** 2)
    emb = jnp.tanh((x1 - l) / math.log(SCALE))
    h = jnp.maximum(jnp.dot(emb, w1, precision=hp) + b1, 0.0)
    xrcn = jnp.maximum(jnp.dot(h, w2, precision=hp) + b2, 0.0)
    return xrcn, emb, lower + upper + median


if __name__ == "__main__":
    key = jax.random.PRNGKey(0)
    N, n_gns, n_bit, n_gsub = 1000, 32, 14, 16
    n_mid = max(n_gsub // 2, n_bit)          # == 14, as in CellTypeNet.__init__

    ks = jax.random.split(key, 8)
    x = jax.random.uniform(ks[0], (N, n_gns), jnp.float32, 0.0, 100.0)
    enc_w = 0.1 * jax.random.normal(ks[1], (n_gns, n_bit), dtype=jnp.float32)
    w1 = 0.1 * jax.random.normal(ks[2], (n_bit, n_mid), dtype=jnp.float32)
    b1 = 0.1 * jax.random.normal(ks[3], (1, n_mid), dtype=jnp.float32)
    w2 = 0.1 * jax.random.normal(ks[4], (n_mid, n_gsub), dtype=jnp.float32)
    b2 = 0.1 * jax.random.normal(ks[5], (1, n_gsub), dtype=jnp.float32)

    # InstNrm Poisson noise: torch.poisson(n0*ones + n1*randn), sampled as glue
    lam = jnp.maximum(10000.0 + 1000.0 * jax.random.normal(ks[6], (N, n_bit)), 0.0)
    noise = jax.random.poisson(ks[7], lam, (N, n_bit)).astype(jnp.float32)

    # tile_n=256 exercises multi-tile pipelining + the padded-column mask at small N
    xrcn, emb, mrgn = cell_type_net_forward(x, noise, enc_w, w1, b1, w2, b2,
                                            tile_n=256)
    jax.block_until_ready((xrcn, emb, mrgn))

    assert xrcn.shape == (N, n_gsub) and emb.shape == (N, n_bit) and mrgn.shape == ()

    xr_r, emb_r, mrgn_r = reference_forward(x, noise, enc_w, w1, b1, w2, b2)
    assert bool(jnp.allclose(emb, emb_r, rtol=1e-3, atol=1e-3)), "emb mismatch"
    assert bool(jnp.allclose(xrcn, xr_r, rtol=1e-2, atol=1e-3)), "xrcn mismatch"
    assert bool(jnp.allclose(mrgn, mrgn_r, rtol=1e-3, atol=1e-3)), "mrgn mismatch"
    print("KERNEL_OK")
</pallas_src>

<mosaic_0001>
module attributes {stable_mosaic.version = 11 : i64} {
  func.func @cell_type_net_kernel(%arg0: i32, %arg1: memref<256x32xf32, #tpu.memory_space<vmem>>, %arg2: memref<14x256xf32, #tpu.memory_space<vmem>>, %arg3: memref<14x32xf32, #tpu.memory_space<vmem>>, %arg4: memref<14x14xf32, #tpu.memory_space<vmem>>, %arg5: memref<14x1xf32, #tpu.memory_space<vmem>>, %arg6: memref<16x14xf32, #tpu.memory_space<vmem>>, %arg7: memref<16x1xf32, #tpu.memory_space<vmem>>, %arg8: memref<30x256xf32, #tpu.memory_space<vmem>>, %arg9: memref<1x8x128xf32, #tpu.memory_space<vmem>>) attributes {dimension_semantics = [#tpu.dimension_semantics<parallel>], iteration_bounds = array<i64: 4>, scalar_prefetch = 0 : i64, scratch_operands = 0 : i64, tpu.core_type = #tpu.core_type<tc>, window_params = [{transform_indices = @transform_0, window_bounds = array<i64: 256, 32>}, {transform_indices = @transform_1, window_bounds = array<i64: 14, 256>}, {pipeline_mode = #tpu.pipeline_mode<synchronous>, transform_indices = @transform_2, window_bounds = array<i64: 14, 32>}, {pipeline_mode = #tpu.pipeline_mode<synchronous>, transform_indices = @transform_3, window_bounds = array<i64: 14, 14>}, {pipeline_mode = #tpu.pipeline_mode<synchronous>, transform_indices = @transform_4, window_bounds = array<i64: 14, 1>}, {pipeline_mode = #tpu.pipeline_mode<synchronous>, transform_indices = @transform_5, window_bounds = array<i64: 16, 14>}, {pipeline_mode = #tpu.pipeline_mode<synchronous>, transform_indices = @transform_6, window_bounds = array<i64: 16, 1>}, {transform_indices = @transform_7, window_bounds = array<i64: 30, 256>}, {transform_indices = @transform_8, window_bounds = array<i64: 1, 8, 128>}]} {
    %c0 = arith.constant 0 : index
    %c0_0 = arith.constant 0 : index
    %0 = vector.load %arg2[%c0, %c0_0] : memref<14x256xf32, #tpu.memory_space<vmem>>, vector<14x256xf32>
    %c0_1 = arith.constant 0 : index
    %c0_2 = arith.constant 0 : index
    %1 = vector.load %arg3[%c0_1, %c0_2] : memref<14x32xf32, #tpu.memory_space<vmem>>, vector<14x32xf32>
    %c0_3 = arith.constant 0 : index
    %c0_4 = arith.constant 0 : index
    %2 = vector.load %arg1[%c0_3, %c0_4] : memref<256x32xf32, #tpu.memory_space<vmem>>, vector<256x32xf32>
    %cst = arith.constant dense<0.000000e+00> : vector<14x256xf32>
    %3 = tpu.matmul %1, %2, %cst {dimension_numbers = #tpu.dot_dimension_numbers<[1], [1], [0], [0], [0, 0, 1, 0], [], []>} : vector<14x32xf32>, vector<256x32xf32>, vector<14x256xf32> -> vector<14x256xf32>
    %4 = arith.addf %3, %0 : vector<14x256xf32>
    %5 = math.log %4 : vector<14x256xf32>
    %cst_5 = arith.constant 0.000000e+00 : f32
    %6 = vector.broadcast %cst_5 : f32 to vector<14x256xf32>
    %7 = vector.extract_strided_slice %5 {offsets = [0, 0], sizes = [1, 256], strides = [1, 1]} : vector<14x256xf32> to vector<1x256xf32>
    %8 = vector.broadcast %7 : vector<1x256xf32> to vector<14x256xf32>
    %9 = arith.cmpf olt, %8, %5 : vector<14x256xf32>
    %10 = arith.extui %9 : vector<14x256xi1> to vector<14x256xi32>
    %11 = arith.sitofp %10 : vector<14x256xi32> to vector<14x256xf32>
    %12 = arith.addf %6, %11 : vector<14x256xf32>
    %13 = vector.extract_strided_slice %5 {offsets = [1, 0], sizes = [1, 256], strides = [1, 1]} : vector<14x256xf32> to vector<1x256xf32>
    %14 = vector.broadcast %13 : vector<1x256xf32> to vector<14x256xf32>
    %15 = arith.cmpf olt, %14, %5 : vector<14x256xf32>
    %16 = arith.extui %15 : vector<14x256xi1> to vector<14x256xi32>
    %17 = arith.sitofp %16 : vector<14x256xi32> to vector<14x256xf32>
    %18 = arith.addf %12, %17 : vector<14x256xf32>
    %19 = vector.extract_strided_slice %5 {offsets = [2, 0], sizes = [1, 256], strides = [1, 1]} : vector<14x256xf32> to vector<1x256xf32>
    %20 = vector.broadcast %19 : vector<1x256xf32> to vector<14x256xf32>
    %21 = arith.cmpf olt, %20, %5 : vector<14x256xf32>
    %22 = arith.extui %21 : vector<14x256xi1> to vector<14x256xi32>
    %23 = arith.sitofp %22 : vector<14x256xi32> to vector<14x256xf32>
    %24 = arith.addf %18, %23 : vector<14x256xf32>
    %25 = vector.extract_strided_slice %5 {offsets = [3, 0], sizes = [1, 256], strides = [1, 1]} : vector<14x256xf32> to vector<1x256xf32>
    %26 = vector.broadcast %25 : vector<1x256xf32> to vector<14x256xf32>
    %27 = arith.cmpf olt, %26, %5 : vector<14x256xf32>
    %28 = arith.extui %27 : vector<14x256xi1> to vector<14x256xi32>
    %29 = arith.sitofp %28 : vector<14x256xi32> to vector<14x256xf32>
    %30 = arith.addf %24, %29 : vector<14x256xf32>
    %31 = vector.extract_strided_slice %5 {offsets = [4, 0], sizes = [1, 256], strides = [1, 1]} : vector<14x256xf32> to vector<1x256xf32>
    %32 = vector.broadcast %31 : vector<1x256xf32> to vector<14x256xf32>
    %33 = arith.cmpf olt, %32, %5 : vector<14x256xf32>
    %34 = arith.extui %33 : vector<14x256xi1> to vector<14x256xi32>
    %35 = arith.sitofp %34 : vector<14x256xi32> to vector<14x256xf32>
    %36 = arith.addf %30, %35 : vector<14x256xf32>
    %37 = vector.extract_strided_slice %5 {offsets = [5, 0], sizes = [1, 256], strides = [1, 1]} : vector<14x256xf32> to vector<1x256xf32>
    %38 = vector.broadcast %37 : vector<1x256xf32> to vector<14x256xf32>
    %39 = arith.cmpf olt, %38, %5 : vector<14x256xf32>
    %40 = arith.extui %39 : vector<14x256xi1> to vector<14x256xi32>
    %41 = arith.sitofp %40 : vector<14x256xi32> to vector<14x256xf32>
    %42 = arith.addf %36, %41 : vector<14x256xf32>
    %43 = vector.extract_strided_slice %5 {offsets = [6, 0], sizes = [1, 256], strides = [1, 1]} : vector<14x256xf32> to vector<1x256xf32>
    %44 = vector.broadcast %43 : vector<1x256xf32> to vector<14x256xf32>
    %45 = arith.cmpf olt, %44, %5 : vector<14x256xf32>
    %46 = arith.extui %45 : vector<14x256xi1> to vector<14x256xi32>
    %47 = arith.sitofp %46 : vector<14x256xi32> to vector<14x256xf32>
    %48 = arith.addf %42, %47 : vector<14x256xf32>
    %49 = vector.extract_strided_slice %5 {offsets = [7, 0], sizes = [1, 256], strides = [1, 1]} : vector<14x256xf32> to vector<1x256xf32>
    %50 = vector.broadcast %49 : vector<1x256xf32> to vector<14x256xf32>
    %51 = arith.cmpf olt, %50, %5 : vector<14x256xf32>
    %52 = arith.extui %51 : vector<14x256xi1> to vector<14x256xi32>
    %53 = arith.sitofp %52 : vector<14x256xi32> to vector<14x256xf32>
    %54 = arith.addf %48, %53 : vector<14x256xf32>
    %55 = vector.extract_strided_slice %5 {offsets = [8, 0], sizes = [1, 256], strides = [1, 1]} : vector<14x256xf32> to vector<1x256xf32>
    %56 = vector.broadcast %55 : vector<1x256xf32> to vector<14x256xf32>
    %57 = arith.cmpf olt, %56, %5 : vector<14x256xf32>
    %58 = arith.extui %57 : vector<14x256xi1> to vector<14x256xi32>
    %59 = arith.sitofp %58 : vector<14x256xi32> to vector<14x256xf32>
    %60 = arith.addf %54, %59 : vector<14x256xf32>
    %61 = vector.extract_strided_slice %5 {offsets = [9, 0], sizes = [1, 256], strides = [1, 1]} : vector<14x256xf32> to vector<1x256xf32>
    %62 = vector.broadcast %61 : vector<1x256xf32> to vector<14x256xf32>
    %63 = arith.cmpf olt, %62, %5 : vector<14x256xf32>
    %64 = arith.extui %63 : vector<14x256xi1> to vector<14x256xi32>
    %65 = arith.sitofp %64 : vector<14x256xi32> to vector<14x256xf32>
    %66 = arith.addf %60, %65 : vector<14x256xf32>
    %67 = vector.extract_strided_slice %5 {offsets = [10, 0], sizes = [1, 256], strides = [1, 1]} : vector<14x256xf32> to vector<1x256xf32>
    %68 = vector.broadcast %67 : vector<1x256xf32> to vector<14x256xf32>
    %69 = arith.cmpf olt, %68, %5 : vector<14x256xf32>
    %70 = arith.extui %69 : vector<14x256xi1> to vector<14x256xi32>
    %71 = arith.sitofp %70 : vector<14x256xi32> to vector<14x256xf32>
    %72 = arith.addf %66, %71 : vector<14x256xf32>
    %73 = vector.extract_strided_slice %5 {offsets = [11, 0], sizes = [1, 256], strides = [1, 1]} : vector<14x256xf32> to vector<1x256xf32>
    %74 = vector.broadcast %73 : vector<1x256xf32> to vector<14x256xf32>
    %75 = arith.cmpf olt, %74, %5 : vector<14x256xf32>
    %76 = arith.extui %75 : vector<14x256xi1> to vector<14x256xi32>
    %77 = arith.sitofp %76 : vector<14x256xi32> to vector<14x256xf32>
    %78 = arith.addf %72, %77 : vector<14x256xf32>
    %79 = vector.extract_strided_slice %5 {offsets = [12, 0], sizes = [1, 256], strides = [1, 1]} : vector<14x256xf32> to vector<1x256xf32>
    %80 = vector.broadcast %79 : vector<1x256xf32> to vector<14x256xf32>
    %81 = arith.cmpf olt, %80, %5 : vector<14x256xf32>
    %82 = arith.extui %81 : vector<14x256xi1> to vector<14x256xi32>
    %83 = arith.sitofp %82 : vector<14x256xi32> to vector<14x256xf32>
    %84 = arith.addf %78, %83 : vector<14x256xf32>
    %85 = vector.extract_strided_slice %5 {offsets = [13, 0], sizes = [1, 256], strides = [1, 1]} : vector<14x256xf32> to vector<1x256xf32>
    %86 = vector.broadcast %85 : vector<1x256xf32> to vector<14x256xf32>
    %87 = arith.cmpf olt, %86, %5 : vector<14x256xf32>
    %88 = arith.extui %87 : vector<14x256xi1> to vector<14x256xi32>
    %89 = arith.sitofp %88 : vector<14x256xi32> to vector<14x256xf32>
    %90 = arith.addf %84, %89 : vector<14x256xf32>
    %cst_6 = arith.constant 6.000000e+00 : f32
    %91 = vector.broadcast %cst_6 : f32 to vector<14x256xf32>
    %92 = arith.cmpf ole, %90, %91 : vector<14x256xf32>
    %cst_7 = arith.constant 7.000000e+00 : f32
    %93 = vector.broadcast %cst_7 : f32 to vector<14x256xf32>
    %94 = arith.cmpf ole, %90, %93 : vector<14x256xf32>
    %cst_8 = arith.constant -3.000000e+38 : f32
    %95 = vector.broadcast %cst_8 : f32 to vector<14x256xf32>
    %96 = arith.select %92, %5, %95 : vector<14x256xi1>, vector<14x256xf32>
    %cst_9 = arith.constant dense<0xFF800000> : vector<256xf32>
    %97 = vector.multi_reduction <maximumf>, %96, %cst_9 [0] : vector<14x256xf32> to vector<256xf32>
    %98 = vector.shape_cast %97 : vector<256xf32> to vector<1x256xf32>
    %cst_10 = arith.constant -3.000000e+38 : f32
    %99 = vector.broadcast %cst_10 : f32 to vector<14x256xf32>
    %100 = arith.select %94, %5, %99 : vector<14x256xi1>, vector<14x256xf32>
    %cst_11 = arith.constant dense<0xFF800000> : vector<256xf32>
    %101 = vector.multi_reduction <maximumf>, %100, %cst_11 [0] : vector<14x256xf32> to vector<256xf32>
    %102 = vector.shape_cast %101 : vector<256xf32> to vector<1x256xf32>
    %103 = arith.addf %98, %102 : vector<1x256xf32>
    %cst_12 = arith.constant 5.000000e-01 : f32
    %104 = vector.broadcast %cst_12 : f32 to vector<1x256xf32>
    %105 = arith.mulf %104, %103 : vector<1x256xf32>
    %106 = vector.broadcast %105 : vector<1x256xf32> to vector<14x256xf32>
    %107 = arith.subf %5, %106 : vector<14x256xf32>
    %cst_13 = arith.constant 0.10399545 : f32
    %108 = vector.broadcast %cst_13 : f32 to vector<14x256xf32>
    %109 = arith.mulf %107, %108 : vector<14x256xf32>
    %110 = math.tanh %109 : vector<14x256xf32>
    %c0_14 = arith.constant 0 : index
    %c0_15 = arith.constant 0 : index
    %111 = vector.load %arg4[%c0_14, %c0_15] : memref<14x14xf32, #tpu.memory_space<vmem>>, vector<14x14xf32>
    %cst_16 = arith.constant dense<0.000000e+00> : vector<14x256xf32>
    %112 = tpu.matmul %111, %110, %cst_16 {dimension_numbers = #tpu.dot_dimension_numbers<[1], [0], [0], [1], [0, 0, 1, 1], [], []>} : vector<14x14xf32>, vector<14x256xf32>, vector<14x256xf32> -> vector<14x256xf32>
    %c0_17 = arith.constant 0 : index
    %c0_18 = arith.constant 0 : index
    %113 = vector.load %arg5[%c0_17, %c0_18] : memref<14x1xf32, #tpu.memory_space<vmem>>, vector<14x1xf32>
    %114 = vector.broadcast %113 : vector<14x1xf32> to vector<14x256xf32>
    %115 = arith.addf %112, %114 : vector<14x256xf32>
    %cst_19 = arith.constant 0.000000e+00 : f32
    %116 = vector.broadcast %cst_19 : f32 to vector<14x256xf32>
    %117 = arith.maximumf %115, %116 : vector<14x256xf32>
    %c0_20 = arith.constant 0 : index
    %c0_21 = arith.constant 0 : index
    %118 = vector.load %arg6[%c0_20, %c0_21] : memref<16x14xf32, #tpu.memory_space<vmem>>, vector<16x14xf32>
    %cst_22 = arith.constant dense<0.000000e+00> : vector<16x256xf32>
    %119 = tpu.matmul %118, %117, %cst_22 {dimension_numbers = #tpu.dot_dimension_numbers<[1], [0], [0], [1], [0, 0, 1, 1], [], []>} : vector<16x14xf32>, vector<14x256xf32>, vector<16x256xf32> -> vector<16x256xf32>
    %c0_23 = arith.constant 0 : index
    %c0_24 = arith.constant 0 : index
    %120 = vector.load %arg7[%c0_23, %c0_24] : memref<16x1xf32, #tpu.memory_space<vmem>>, vector<16x1xf32>
    %121 = vector.broadcast %120 : vector<16x1xf32> to vector<16x256xf32>
    %122 = arith.addf %119, %121 : vector<16x256xf32>
    %cst_25 = arith.constant 0.000000e+00 : f32
    %123 = vector.broadcast %cst_25 : f32 to vector<16x256xf32>
    %124 = arith.maximumf %122, %123 : vector<16x256xf32>
    %125 = tpu.concatenate %124, %110 in 0 : vector<16x256xf32>, vector<14x256xf32> -> vector<30x256xf32>
    %c0_26 = arith.constant 0 : index
    %c0_27 = arith.constant 0 : index
    %126 = vector.load %arg8[%c0_26, %c0_27] : memref<30x256xf32, #tpu.memory_space<vmem>>, vector<30x256xf32>
    tpu.vector_store %arg8[%c0_26, %c0_27], %125 {strides = array<i32>} : memref<30x256xf32, #tpu.memory_space<vmem>>, vector<30x256xf32>,
    %127 = tpu.iota {dimensions = array<i32: 1>} : vector<1x256xi32>
    %c256_i32 = arith.constant 256 : i32
    %128 = arith.muli %arg0, %c256_i32 : i32
    %129 = vector.broadcast %128 : i32 to vector<1x256xi32>
    %130 = arith.addi %127, %129 : vector<1x256xi32>
    %c1000_i32 = arith.constant 1000 : i32
    %131 = vector.broadcast %c1000_i32 : i32 to vector<1x256xi32>
    %132 = arith.cmpi slt, %130, %131 : vector<1x256xi32>
    %133 = arith.extui %132 : vector<1x256xi1> to vector<1x256xi32>
    %134 = arith.sitofp %133 : vector<1x256xi32> to vector<1x256xf32>
    %cst_28 = arith.constant 5.000000e+04 : f32
    %135 = vector.broadcast %cst_28 : f32 to vector<14x256xf32>
    %136 = arith.subf %135, %3 : vector<14x256xf32>
    %cst_29 = arith.constant 0.000000e+00 : f32
    %137 = vector.broadcast %cst_29 : f32 to vector<14x256xf32>
    %138 = arith.maximumf %136, %137 : vector<14x256xf32>
    %139 = arith.mulf %138, %138 : vector<14x256xf32>
    %140 = vector.broadcast %134 : vector<1x256xf32> to vector<14x256xf32>
    %141 = arith.mulf %139, %140 : vector<14x256xf32>
    %142 = vector.shape_cast %141 : vector<14x256xf32> to vector<1x14x256xf32>
    %cst_30 = arith.constant dense<0.000000e+00> : vector<1xf32>
    %143 = vector.multi_reduction <add>, %142, %cst_30 [1, 2] : vector<1x14x256xf32> to vector<1xf32>
    %144 = vector.shape_cast %143 : vector<1xf32> to vector<1x1x1xf32>
    %145 = vector.extract %144[0, 0, 0] : f32 from vector<1x1x1xf32>
    %cst_31 = arith.constant 2.500000e+05 : f32
    %146 = vector.broadcast %cst_31 : f32 to vector<14x256xf32>
    %147 = arith.subf %3, %146 : vector<14x256xf32>
    %cst_32 = arith.constant 0.000000e+00 : f32
    %148 = vector.broadcast %cst_32 : f32 to vector<14x256xf32>
    %149 = arith.maximumf %147, %148 : vector<14x256xf32>
    %150 = arith.mulf %149, %149 : vector<14x256xf32>
    %151 = vector.broadcast %134 : vector<1x256xf32> to vector<14x256xf32>
    %152 = arith.mulf %150, %151 : vector<14x256xf32>
    %153 = vector.shape_cast %152 : vector<14x256xf32> to vector<1x14x256xf32>
    %cst_33 = arith.constant dense<0.000000e+00> : vector<1xf32>
    %154 = vector.multi_reduction <add>, %153, %cst_33 [1, 2] : vector<1x14x256xf32> to vector<1xf32>
    %155 = vector.shape_cast %154 : vector<1xf32> to vector<1x1x1xf32>
    %156 = vector.extract %155[0, 0, 0] : f32 from vector<1x1x1xf32>
    %cst_34 = arith.constant -1.000000e+00 : f32
    %157 = vector.broadcast %cst_34 : f32 to vector<14x256xf32>
    %158 = arith.select %94, %4, %157 : vector<14x256xi1>, vector<14x256xf32>
    %cst_35 = arith.constant dense<0xFF800000> : vector<256xf32>
    %159 = vector.multi_reduction <maximumf>, %158, %cst_35 [0] : vector<14x256xf32> to vector<256xf32>
    %160 = vector.shape_cast %159 : vector<256xf32> to vector<1x256xf32>
    %cst_36 = arith.constant 1.000000e+05 : f32
    %161 = vector.broadcast %cst_36 : f32 to vector<14x256xf32>
    %162 = arith.subf %161, %4 : vector<14x256xf32>
    %cst_37 = arith.constant 0.000000e+00 : f32
    %163 = vector.broadcast %cst_37 : f32 to vector<14x256xf32>
    %164 = arith.maximumf %162, %163 : vector<14x256xf32>
    %165 = arith.mulf %164, %164 : vector<14x256xf32>
    %166 = vector.broadcast %102 : vector<1x256xf32> to vector<14x256xf32>
    %167 = arith.cmpf ogt, %5, %166 : vector<14x256xf32>
    %168 = arith.extui %167 : vector<14x256xi1> to vector<14x256xi32>
    %169 = arith.sitofp %168 : vector<14x256xi32> to vector<14x256xf32>
    %cst_38 = arith.constant dense<0.000000e+00> : vector<256xf32>
    %170 = vector.multi_reduction <add>, %169, %cst_38 [0] : vector<14x256xf32> to vector<256xf32>
    %171 = vector.shape_cast %170 : vector<256xf32> to vector<1x256xf32>
    %cst_39 = arith.constant 1.000000e+05 : f32
    %172 = vector.broadcast %cst_39 : f32 to vector<1x256xf32>
    %173 = arith.subf %172, %160 : vector<1x256xf32>
    %cst_40 = arith.constant 0.000000e+00 : f32
    %174 = vector.broadcast %cst_40 : f32 to vector<1x256xf32>
    %175 = arith.maximumf %173, %174 : vector<1x256xf32>
    %176 = arith.mulf %175, %175 : vector<1x256xf32>
    %177 = arith.mulf %165, %169 : vector<14x256xf32>
    %cst_41 = arith.constant dense<0.000000e+00> : vector<256xf32>
    %178 = vector.multi_reduction <add>, %177, %cst_41 [0] : vector<14x256xf32> to vector<256xf32>
    %179 = vector.shape_cast %178 : vector<256xf32> to vector<1x256xf32>
    %cst_42 = arith.constant 7.000000e+00 : f32
    %180 = vector.broadcast %cst_42 : f32 to vector<1x256xf32>
    %181 = arith.subf %180, %171 : vector<1x256xf32>
    %182 = arith.mulf %181, %176 : vector<1x256xf32>
    %183 = arith.addf %179, %182 : vector<1x256xf32>
    %184 = arith.mulf %183, %134 : vector<1x256xf32>
    %185 = vector.shape_cast %184 : vector<1x256xf32> to vector<1x1x256xf32>
    %cst_43 = arith.constant dense<0.000000e+00> : vector<1xf32>
    %186 = vector.multi_reduction <add>, %185, %cst_43 [1, 2] : vector<1x1x256xf32> to vector<1xf32>
    %187 = vector.shape_cast %186 : vector<1xf32> to vector<1x1x1xf32>
    %188 = vector.extract %187[0, 0, 0] : f32 from vector<1x1x1xf32>
    %189 = tpu.iota {dimensions = array<i32: 0>} : vector<8x128xi32>
    %c0_i32 = arith.constant 0 : i32
    %190 = vector.broadcast %c0_i32 : i32 to vector<8x128xi32>
    %191 = arith.cmpi eq, %189, %190 : vector<8x128xi32>
    %c1_i32 = arith.constant 1 : i32
    %192 = vector.broadcast %c1_i32 : i32 to vector<8x128xi32>
    %193 = arith.cmpi eq, %189, %192 : vector<8x128xi32>
    %c2_i32 = arith.constant 2 : i32
    %194 = vector.broadcast %c2_i32 : i32 to vector<8x128xi32>
    %195 = arith.cmpi eq, %189, %194 : vector<8x128xi32>
    %cst_44 = arith.constant 0.000000e+00 : f32
    %196 = vector.broadcast %188 : f32 to vector<8x128xf32>
    %197 = vector.broadcast %cst_44 : f32 to vector<8x128xf32>
    %198 = arith.select %195, %196, %197 : vector<8x128xi1>, vector<8x128xf32>
    %199 = vector.broadcast %156 : f32 to vector<8x128xf32>
    %200 = arith.select %193, %199, %198 : vector<8x128xi1>, vector<8x128xf32>
    %201 = vector.broadcast %145 : f32 to vector<8x128xf32>
    %202 = arith.select %191, %201, %200 : vector<8x128xi1>, vector<8x128xf32>
    %c0_45 = arith.constant 0 : index
    %c0_46 = arith.constant 0 : index
    %c0_47 = arith.constant 0 : index
    %203 = vector.load %arg9[%c0_45, %c0_46, %c0_47] : memref<1x8x128xf32, #tpu.memory_space<vmem>>, vector<1x8x128xf32>
    %204 = vector.shape_cast %203 : vector<1x8x128xf32> to vector<8x128xf32>
    %205 = vector.shape_cast %202 : vector<8x128xf32> to vector<1x8x128xf32>
    tpu.vector_store %arg9[%c0_45, %c0_46, %c0_47], %205 {strides = array<i32>} : memref<1x8x128xf32, #tpu.memory_space<vmem>>, vector<1x8x128xf32>,
    return
  }
  func.func @transform_0(%arg0: i32) -> (i32, i32) {
    %c0_i32 = arith.constant 0 : i32
    %c0_i32_0 = arith.constant 0 : i32
    return %arg0, %c0_i32 : i32, i32
  }
  func.func @transform_1(%arg0: i32) -> (i32, i32) {
    %c0_i32 = arith.constant 0 : i32
    %c0_i32_0 = arith.constant 0 : i32
    return %c0_i32, %arg0 : i32, i32
  }
  func.func @transform_2(%arg0: i32) -> (i32, i32) {
    %c0_i32 = arith.constant 0 : i32
    %c0_i32_0 = arith.constant 0 : i32
    %c0_i32_1 = arith.constant 0 : i32
    return %c0_i32, %c0_i32_0 : i32, i32
  }
  func.func @transform_3(%arg0: i32) -> (i32, i32) {
    %c0_i32 = arith.constant 0 : i32
    %c0_i32_0 = arith.constant 0 : i32
    %c0_i32_1 = arith.constant 0 : i32
    return %c0_i32, %c0_i32_0 : i32, i32
  }
  func.func @transform_4(%arg0: i32) -> (i32, i32) {
    %c0_i32 = arith.constant 0 : i32
    %c0_i32_0 = arith.constant 0 : i32
    %c0_i32_1 = arith.constant 0 : i32
    return %c0_i32, %c0_i32_0 : i32, i32
  }
  func.func @transform_5(%arg0: i32) -> (i32, i32) {
    %c0_i32 = arith.constant 0 : i32
    %c0_i32_0 = arith.constant 0 : i32
    %c0_i32_1 = arith.constant 0 : i32
    return %c0_i32, %c0_i32_0 : i32, i32
  }
  func.func @transform_6(%arg0: i32) -> (i32, i32) {
    %c0_i32 = arith.constant 0 : i32
    %c0_i32_0 = arith.constant 0 : i32
    %c0_i32_1 = arith.constant 0 : i32
    return %c0_i32, %c0_i32_0 : i32, i32
  }
  func.func @transform_7(%arg0: i32) -> (i32, i32) {
    %c0_i32 = arith.constant 0 : i32
    %c0_i32_0 = arith.constant 0 : i32
    return %c0_i32, %arg0 : i32, i32
  }
  func.func @transform_8(%arg0: i32) -> (i32, i32, i32) {
    %c0_i32 = arith.constant 0 : i32
    %c0_i32_0 = arith.constant 0 : i32
    %c0_i32_1 = arith.constant 0 : i32
    return %arg0, %c0_i32, %c0_i32_0 : i32, i32, i32
  }
}

</mosaic_0001>

<llo_original>
// kernel: tpu_custom_call.1
$region0: #{tpu_custom_call.1}
  #allocation0 [shape = 'u32[]', space=smem, size = 0x4, offset = 0x4, fixed_abs, tag = 'smem constant byte address 0x4 - core index']
  #allocation1 [shape = 'u32[144,128]{1,0:T(1,128)}', space=vmem, size = 0x12000, scoped, tag = 'internal scratch']
  %s0 = inlined_call_operand.vmem [shape: f32[1024,32], index: 0, kind: input, shape index: {}]
  %s1 = inlined_call_operand.vmem [shape: f32[14,1024], index: 1, kind: input, shape index: {}]
  %s2 = inlined_call_operand.vmem [shape: f32[14,32], index: 2, kind: input, shape index: {}]
  %s3 = inlined_call_operand.vmem [shape: f32[14,14], index: 3, kind: input, shape index: {}]
  %s4 = inlined_call_operand.vmem [shape: f32[14,1], index: 4, kind: input, shape index: {}]
  %s5 = inlined_call_operand.vmem [shape: f32[16,14], index: 5, kind: input, shape index: {}]
  %s6 = inlined_call_operand.vmem [shape: f32[16,1], index: 6, kind: input, shape index: {}]
  %s7 = inlined_call_operand.hbm [shape: f32[30,1024], index: 7, kind: output, shape index: {0}]
  %s8 = inlined_call_operand.hbm [shape: f32[4,8,128], index: 8, kind: output, shape index: {1}]
  %9 = xla_tuple %s7, %s8
  %s10 = sld [smem:[#allocation0]]
  $region92: #{tpu_custom_call.1} parent=0
    _
  %s12 = ssub.s32 1, %s10
  %s13 = scalar_select 0, %s12, %s10
  $region1: #{tpu_custom_call.1} parent=0
    #allocation2 [shape = 'u8[32768]{0}', space=vmem, size = 0x8000, scoped, tag = 'input window, operand 1']
    #allocation3 [shape = 'u8[65536]{0}', space=vmem, size = 0x10000, scoped, tag = 'output window, operand 0']
    #allocation4 [shape = 's32[2]{0}', space=sflag, size = 0x8, scoped, tag = 'scoped memory for tpu_custom_call.1']
    #allocation5 [shape = 'u8[8192]{0}', space=vmem, size = 0x2000, scoped, tag = 'output window, operand 1']
    #allocation6 [shape = 's32[2]{0}', space=sflag, size = 0x8, scoped, tag = 'scoped memory for tpu_custom_call.1']
    %14 = vsyncpa [#allocation4], 0
    %s15 = scalar_lea.sflag [#allocation4], 1
    %16 = vsyncpa %s15, 0
    %17 = vsyncpa [#allocation6], 0
    %s18 = scalar_lea.sflag [#allocation6], 1
    %19 = vsyncpa %s18, 0
    loop: start=0, step=1, limit=6
    $region2: #{tpu_custom_call.1} parent=1 // loop_pre_header
      _
    $region3: #{tpu_custom_call.1} parent=1 // loop_header
      %s21 = sphi 0, %s25
      %p22 = scmp.ge.s32.totalorder %s21, 6
      %s31 = sphi 0, %s33
      %s34 = sphi 0, %s31
      %s35 = sphi 0, %s34
      %s51 = sphi 0, %s35
      %s57 = sphi 0, %s59
      %s60 = sphi 0, %s57
      %s61 = sphi 0, %s60
      %s77 = sphi 0, %s61
      %s81 = sphi 0, %s81
      %s83 = sphi 0, %s81
      %s84 = sphi 0, %s83
      %s98 = sphi 0, %s84
      %s102 = sphi 0, %s102
      %s104 = sphi 0, %s102
      %s105 = sphi 0, %s104
      %s119 = sphi 0, %s105
      %s123 = sphi 0, %s123
      %s125 = sphi 0, %s123
      %s126 = sphi 0, %s125
      %s140 = sphi 0, %s126
      %s144 = sphi 0, %s144
      %s146 = sphi 0, %s144
      %s147 = sphi 0, %s146
      %s161 = sphi 0, %s147
      %s165 = sphi 0, %s165
      %s167 = sphi 0, %s165
      %s168 = sphi 0, %s167
      %s182 = sphi 0, %s168
      %s188 = sphi 0, %s190
      %s191 = sphi 0, %s188
      %s192 = sphi 0, %s191
      %s208 = sphi 0, %s192
      %s214 = sphi 0, %s216
      %s217 = sphi 0, %s214
      %s218 = sphi 0, %s217
      %s234 = sphi 0, %s218
    $region4: #{tpu_custom_call.1} parent=1 // loop_header_branch
      %24 = sbr.rel (%p22) target = $region8
    $region5: #{tpu_custom_call.1} parent=1 // loop_body
      %s26 = ssub.s32 %s21, 1
      %s27 = ssub.s32 %s21, 2
      %s28 = sadd.s32 %s21, 1
      %s29 = ssub.s32 %s21, %s28
      %p30 = scmp.eq.s32.totalorder %s29, 0
      %s32 = sadd.s32 %s31, 1
      %s33 = scalar_select %p30, %s31, %s32
      %p36 = pneg %p30
      %p37 = scmp.eq.s32.totalorder %s21, 3
      %p38 = por %p36, %p37
      %p39 = scmp.ne.s32.totalorder %s31, %s34
      %p40 = scmp.eq.s32.totalorder %s21, 0
      %p41 = por %p39, %p40
      %p42 = scmp.ne.s32.totalorder %s31, %s34
      %p43 = scmp.eq.s32.totalorder %s26, 3
      %p44 = por %p42, %p43
      %p45 = scmp.ne.s32.totalorder %s34, %s35
      %p46 = scmp.eq.s32.totalorder %s26, 0
      %p47 = por %p45, %p46
      %p48 = scmp.ne.s32.totalorder %s34, %s35
      %p49 = scmp.eq.s32.totalorder %s27, 3
      %p50 = por %p48, %p49
      %p52 = scmp.ne.s32.totalorder %s35, %s51
      %p53 = scmp.eq.s32.totalorder %s27, 0
      %p54 = por %p52, %p53
      %s55 = ssub.s32 %s21, %s28
      %p56 = scmp.eq.s32.totalorder %s55, 0
      %s58 = sadd.s32 %s57, 1
      %s59 = scalar_select %p56, %s57, %s58
      %p62 = pneg %p56
      %p63 = scmp.eq.s32.totalorder %s21, 3
      %p64 = por %p62, %p63
      %p65 = scmp.ne.s32.totalorder %s57, %s60
      %p66 = scmp.eq.s32.totalorder %s21, 0
      %p67 = por %p65, %p66
      %p68 = scmp.ne.s32.totalorder %s57, %s60
      %p69 = scmp.eq.s32.totalorder %s26, 3
      %p70 = por %p68, %p69
      %p71 = scmp.ne.s32.totalorder %s60, %s61
      %p72 = scmp.eq.s32.totalorder %s26, 0
      %p73 = por %p71, %p72
      %p74 = scmp.ne.s32.totalorder %s60, %s61
      %p75 = scmp.eq.s32.totalorder %s27, 3
      %p76 = por %p74, %p75
      %p78 = scmp.ne.s32.totalorder %s61, %s77
      %p79 = scmp.eq.s32.totalorder %s27, 0
      %p80 = por %p78, %p79
      %s82 = sadd.s32 %s81, 1
      %p85 = scmp.eq.s32.totalorder %s21, 3
      %p86 = scmp.ne.s32.totalorder %s81, %s83
      %p87 = scmp.eq.s32.totalorder %s21, 0
      %p88 = por %p86, %p87
      %p89 = scmp.ne.s32.totalorder %s81, %s83
      %p90 = scmp.eq.s32.totalorder %s26, 3
      %p91 = por %p89, %p90
      %p92 = scmp.ne.s32.totalorder %s83, %s84
      %p93 = scmp.eq.s32.totalorder %s26, 0
      %p94 = por %p92, %p93
      %p95 = scmp.ne.s32.totalorder %s83, %s84
      %p96 = scmp.eq.s32.totalorder %s27, 3
      %p97 = por %p95, %p96
      %p99 = scmp.ne.s32.totalorder %s84, %s98
      %p100 = scmp.eq.s32.totalorder %s27, 0
      %p101 = por %p99, %p100
      %s103 = sadd.s32 %s102, 1
      %p106 = scmp.eq.s32.totalorder %s21, 3
      %p107 = scmp.ne.s32.totalorder %s102, %s104
      %p108 = scmp.eq.s32.totalorder %s21, 0
      %p109 = por %p107, %p108
      %p110 = scmp.ne.s32.totalorder %s102, %s104
      %p111 = scmp.eq.s32.totalorder %s26, 3
      %p112 = por %p110, %p111
      %p113 = scmp.ne.s32.totalorder %s104, %s105
      %p114 = scmp.eq.s32.totalorder %s26, 0
      %p115 = por %p113, %p114
      %p116 = scmp.ne.s32.totalorder %s104, %s105
      %p117 = scmp.eq.s32.totalorder %s27, 3
      %p118 = por %p116, %p117
      %p120 = scmp.ne.s32.totalorder %s105, %s119
      %p121 = scmp.eq.s32.totalorder %s27, 0
      %p122 = por %p120, %p121
      %s124 = sadd.s32 %s123, 1
      %p127 = scmp.eq.s32.totalorder %s21, 3
      %p128 = scmp.ne.s32.totalorder %s123, %s125
      %p129 = scmp.eq.s32.totalorder %s21, 0
      %p130 = por %p128, %p129
      %p131 = scmp.ne.s32.totalorder %s123, %s125
      %p132 = scmp.eq.s32.totalorder %s26, 3
      %p133 = por %p131, %p132
      %p134 = scmp.ne.s32.totalorder %s125, %s126
      %p135 = scmp.eq.s32.totalorder %s26, 0
      %p136 = por %p134, %p135
      %p137 = scmp.ne.s32.totalorder %s125, %s126
      %p138 = scmp.eq.s32.totalorder %s27, 3
      %p139 = por %p137, %p138
      %p141 = scmp.ne.s32.totalorder %s126, %s140
      %p142 = scmp.eq.s32.totalorder %s27, 0
      %p143 = por %p141, %p142
      %s145 = sadd.s32 %s144, 1
      %p148 = scmp.eq.s32.totalorder %s21, 3
      %p149 = scmp.ne.s32.totalorder %s144, %s146
      %p150 = scmp.eq.s32.totalorder %s21, 0
      %p151 = por %p149, %p150
      %p152 = scmp.ne.s32.totalorder %s144, %s146
      %p153 = scmp.eq.s32.totalorder %s26, 3
      %p154 = por %p152, %p153
      %p155 = scmp.ne.s32.totalorder %s146, %s147
      %p156 = scmp.eq.s32.totalorder %s26, 0
      %p157 = por %p155, %p156
      %p158 = scmp.ne.s32.totalorder %s146, %s147
      %p159 = scmp.eq.s32.totalorder %s27, 3
      %p160 = por %p158, %p159
      %p162 = scmp.ne.s32.totalorder %s147, %s161
      %p163 = scmp.eq.s32.totalorder %s27, 0
      %p164 = por %p162, %p163
      %s166 = sadd.s32 %s165, 1
      %p169 = scmp.eq.s32.totalorder %s21, 3
      %p170 = scmp.ne.s32.totalorder %s165, %s167
      %p171 = scmp.eq.s32.totalorder %s21, 0
      %p172 = por %p170, %p171
      %p173 = scmp.ne.s32.totalorder %s165, %s167
      %p174 = scmp.eq.s32.totalorder %s26, 3
      %p175 = por %p173, %p174
      %p176 = scmp.ne.s32.totalorder %s167, %s168
      %p177 = scmp.eq.s32.totalorder %s26, 0
      %p178 = por %p176, %p177
      %p179 = scmp.ne.s32.totalorder %s167, %s168
      %p180 = scmp.eq.s32.totalorder %s27, 3
      %p181 = por %p179, %p180
      %p183 = scmp.ne.s32.totalorder %s168, %s182
      %p184 = scmp.eq.s32.totalorder %s27, 0
      %p185 = por %p183, %p184
      %s186 = ssub.s32 %s21, %s28
      %p187 = scmp.eq.s32.totalorder %s186, 0
      %s189 = sadd.s32 %s188, 1
      %s190 = scalar_select %p187, %s188, %s189
      %p193 = pneg %p187
      %p194 = scmp.eq.s32.totalorder %s21, 3
      %p195 = por %p193, %p194
      %p196 = scmp.ne.s32.totalorder %s188, %s191
      %p197 = scmp.eq.s32.totalorder %s21, 0
      %p198 = por %p196, %p197
      %p199 = scmp.ne.s32.totalorder %s188, %s191
      %p200 = scmp.eq.s32.totalorder %s26, 3
      %p201 = por %p199, %p200
      %p202 = scmp.ne.s32.totalorder %s191, %s192
      %p203 = scmp.eq.s32.totalorder %s26, 0
      %p204 = por %p202, %p203
      %p205 = scmp.ne.s32.totalorder %s191, %s192
      %p206 = scmp.eq.s32.totalorder %s27, 3
      %p207 = por %p205, %p206
      %p209 = scmp.ne.s32.totalorder %s192, %s208
      %p210 = scmp.eq.s32.totalorder %s27, 0
      %p211 = por %p209, %p210
      %s212 = ssub.s32 %s21, %s28
      %p213 = scmp.eq.s32.totalorder %s212, 0
      %s215 = sadd.s32 %s214, 1
      %s216 = scalar_select %p213, %s214, %s215
      %p219 = pneg %p213
      %p220 = scmp.eq.s32.totalorder %s21, 3
      %p221 = por %p219, %p220
      %p222 = scmp.ne.s32.totalorder %s214, %s217
      %p223 = scmp.eq.s32.totalorder %s21, 0
      %p224 = por %p222, %p223
      %p225 = scmp.ne.s32.totalorder %s214, %s217
      %p226 = scmp.eq.s32.totalorder %s26, 3
      %p227 = por %p225, %p226
      %p228 = scmp.ne.s32.totalorder %s217, %s218
      %p229 = scmp.eq.s32.totalorder %s26, 0
      %p230 = por %p228, %p229
      %p231 = scmp.ne.s32.totalorder %s217, %s218
      %p232 = scmp.eq.s32.totalorder %s27, 3
      %p233 = por %p231, %p232
      %p235 = scmp.ne.s32.totalorder %s218, %s234
      %p236 = scmp.eq.s32.totalorder %s27, 0
      %p237 = por %p235, %p236
      %p238 = scmp.le.s32.totalorder 1, %s21
      %p239 = scmp.lt.s32.totalorder %s21, 5
      %p240 = pnand %p238, %p239
      %p241 = pneg %p240
      // Predicated region
      $region9: #{tpu_custom_call.1} parent=5 // pred_check
        _
      $region10: #{tpu_custom_call.1} parent=5 // pred_check_branch
        %243 = sbr.rel (%p240) target = $region12
      $region11: #{tpu_custom_call.1} parent=5 // pred_region
        %s244 = ssub.s32 %s21, 1
        // Predicated region
        $region13: #{tpu_custom_call.1} parent=11 // pred_check
          %p245 = pneg %p94
        $region14: #{tpu_custom_call.1} parent=11 // pred_check_branch
          %247 = sbr.rel (%p245) target = $region16
        $region15: #{tpu_custom_call.1} parent=11 // pred_region
          _
        $region16: #{tpu_custom_call.1} parent=11 // pred_fallthru
          _
        // Predicated region
        $region17: #{tpu_custom_call.1} parent=11 // pred_check
          %p248 = pneg %p115
        $region18: #{tpu_custom_call.1} parent=11 // pred_check_branch
          %250 = sbr.rel (%p248) target = $region20
        $region19: #{tpu_custom_call.1} parent=11 // pred_region
          _
        $region20: #{tpu_custom_call.1} parent=11 // pred_fallthru
          _
        // Predicated region
        $region21: #{tpu_custom_call.1} parent=11 // pred_check
          %p251 = pneg %p136
        $region22: #{tpu_custom_call.1} parent=11 // pred_check_branch
          %253 = sbr.rel (%p251) target = $region24
        $region23: #{tpu_custom_call.1} parent=11 // pred_region
          _
        $region24: #{tpu_custom_call.1} parent=11 // pred_fallthru
          _
        // Predicated region
        $region25: #{tpu_custom_call.1} parent=11 // pred_check
          %p254 = pneg %p157
        $region26: #{tpu_custom_call.1} parent=11 // pred_check_branch
          %256 = sbr.rel (%p254) target = $region28
        $region27: #{tpu_custom_call.1} parent=11 // pred_region
          _
        $region28: #{tpu_custom_call.1} parent=11 // pred_fallthru
          _
        // Predicated region
        $region29: #{tpu_custom_call.1} parent=11 // pred_check
          %p257 = pneg %p178
        $region30: #{tpu_custom_call.1} parent=11 // pred_check_branch
          %259 = sbr.rel (%p257) target = $region32
        $region31: #{tpu_custom_call.1} parent=11 // pred_region
          _
        $region32: #{tpu_custom_call.1} parent=11 // pred_fallthru
          _
      $region12: #{tpu_custom_call.1} parent=5 // pred_fallthru
        _
      %p260 = scmp.lt.s32.totalorder %s21, 4
      // Predicated region
      $region33: #{tpu_custom_call.1} parent=5 // pred_check
        %p261 = pneg %p260
      $region34: #{tpu_custom_call.1} parent=5 // pred_check_branch
        %263 = sbr.rel (%p261) target = $region36
      $region35: #{tpu_custom_call.1} parent=5 // pred_region
        // Predicated region
        $region37: #{tpu_custom_call.1} parent=35 // pred_check
          %p264 = pneg %p41
        $region38: #{tpu_custom_call.1} parent=35 // pred_check_branch
          %266 = sbr.rel (%p264) target = $region40
        $region39: #{tpu_custom_call.1} parent=35 // pred_region
          %s267 = smul.u32 32, %s21
          %p268 = scmp.lt.s32.totalorder %s267, 127
          %s269 = scalar_select %p268, %s267, 127
          %s270 = smul.addr %s269, 8
          %s271 = scalar_lea.vmem %s0, %s270
          %s272 = smul.u32 32, %s21
        $region40: #{tpu_custom_call.1} parent=35 // pred_fallthru
          _
        // Predicated region
        $region41: #{tpu_custom_call.1} parent=35 // pred_check
          %p273 = pneg %p67
        $region42: #{tpu_custom_call.1} parent=35 // pred_check_branch
          %275 = sbr.rel (%p273) target = $region44
        $region43: #{tpu_custom_call.1} parent=35 // pred_region
          %s276 = sand.u32 %s57, 1
          %s277 = sand.u32 %s57, 1
          %s278 = smul.addr %s277, 32
          %s279 = scalar_lea.vmem [#allocation2], %s278
          %s280 = smul.u32 2, %s21
          %s281 = smul.addr %s280, 8
          %s282 = scalar_lea.vmem %s1, %s281
          // Predicated region
          $region45: #{tpu_custom_call.1} parent=43 // pred_check
            _
          $region46: #{tpu_custom_call.1} parent=43 // pred_check_branch
            %284 = sbr.rel (0) target = $region48
          $region47: #{tpu_custom_call.1} parent=43 // pred_region
            // Predicated region
            $region49: #{tpu_custom_call.1} parent=47 // pred_check
              _
            $region50: #{tpu_custom_call.1} parent=47 // pred_check_branch
              %286 = sbr.rel (0) target = $region52
            $region51: #{tpu_custom_call.1} parent=47 // pred_region
              loop: start=0, step=1, limit=1
              $region53: #{tpu_custom_call.1} parent=51 // loop_pre_header
                _
              $region54: #{tpu_custom_call.1} parent=51 // loop_header
                %s288 = sphi 0, %s292
                %p289 = scmp.ge.s32.totalorder %s288, 1
                %s293 = sphi %s282, %s282
                %s294 = sphi %s279, %s279
              $region55: #{tpu_custom_call.1} parent=51 // loop_header_branch
                %291 = sbr.rel (%p289) target = $region59
              $region56: #{tpu_custom_call.1} parent=51 // loop_body
                %v295 = vld [vmem:[%s293] sm:$0xff]
                %296 = vst [vmem:[%s294] sm:$0xff] %v295
                %v297 = vld [vmem:[%s293 + $0x8] sm:$0xff]
                %298 = vst [vmem:[%s294 + $0x8] sm:$0xff] %v297
                %v299 = vld [vmem:[%s293 + $0x40] sm:$0xff]
                %300 = vst [vmem:[%s294 + $0x10] sm:$0xff] %v299
                %v301 = vld [vmem:[%s293 + $0x48] sm:$0xff]
                %302 = vst [vmem:[%s294 + $0x18] sm:$0xff] %v301
              $region57: #{tpu_custom_call.1} parent=51 // loop_footer
                %s292 = sadd.s32 1, %s288
              $region58: #{tpu_custom_call.1} parent=51 // loop_footer_branch
                %287 = sbr.rel target = $region54
              $region59: #{tpu_custom_call.1} parent=51 // loop_exit
                _
            $region52: #{tpu_custom_call.1} parent=47 // pred_fallthru
              _
            // Predicated region
            $region60: #{tpu_custom_call.1} parent=47 // pred_check
              _
            $region61: #{tpu_custom_call.1} parent=47 // pred_check_branch
              %304 = sbr.rel target = $region63
            $region62: #{tpu_custom_call.1} parent=47 // pred_region
              _
            $region63: #{tpu_custom_call.1} parent=47 // pred_fallthru
              _
          $region48: #{tpu_custom_call.1} parent=43 // pred_fallthru
            _
          %305 = vnop
        $region44: #{tpu_custom_call.1} parent=35 // pred_fallthru
          _
      $region36: #{tpu_custom_call.1} parent=5 // pred_fallthru
        _
      %p306 = scmp.le.s32.totalorder 1, %s21
      %p307 = scmp.lt.s32.totalorder %s21, 5
      %p308 = pnand %p306, %p307
      %p309 = pneg %p308
      // Predicated region
      $region64: #{tpu_custom_call.1} parent=5 // pred_check
        _
      $region65: #{tpu_custom_call.1} parent=5 // pred_check_branch
        %311 = sbr.rel (%p308) target = $region67
      $region66: #{tpu_custom_call.1} parent=5 // pred_region
        %s312 = ssub.s32 %s21, 1
        %s313 = sand.u32 %s60, 1
        %s314 = sand.u32 %s60, 1
        %s315 = smul.addr %s314, 32
        %s316 = scalar_lea.vmem [#allocation2], %s315
        // Predicated region
        $region68: #{tpu_custom_call.1} parent=66 // pred_check
          %p317 = pneg %p73
        $region69: #{tpu_custom_call.1} parent=66 // pred_check_branch
          %319 = sbr.rel (%p317) target = $region71
        $region70: #{tpu_custom_call.1} parent=66 // pred_region
          _
        $region71: #{tpu_custom_call.1} parent=66 // pred_fallthru
          _
        %s320 = smul.u32 32, %s26
        %p321 = scmp.lt.s32.totalorder %s320, 127
        %s322 = scalar_select %p321, %s320, 127
        %s323 = smul.addr %s322, 8
        %s324 = scalar_lea.vmem %s0, %s323
        %p325 = pneg %p47
        %p326 = pneg %p44
        %s327 = sand.u32 %s60, 1
        %s328 = sand.u32 %s60, 1
        %s329 = smul.addr %s328, 32
        %s330 = scalar_lea.vmem [#allocation2], %s329
        %p331 = pneg %p73
        %p332 = pneg %p70
        %p333 = pneg %p94
        %p334 = pneg %p91
        %p335 = pneg %p115
        %p336 = pneg %p112
        %p337 = pneg %p136
        %p338 = pneg %p133
        %p339 = pneg %p157
        %p340 = pneg %p154
        %p341 = pneg %p178
        %p342 = pneg %p175
        %p343 = pneg %p204
        %p344 = pneg %p201
        %s345 = sand.u32 %s191, 1
        %s346 = scalar_lea.sflag [#allocation4], %s345
        %s347 = sand.u32 %s191, 1
        %s348 = smul.addr %s347, 64
        %s349 = scalar_lea.vmem [#allocation3], %s348
        %p350 = pneg %p230
        %p351 = pneg %p227
        %s352 = sand.u32 %s217, 1
        %s353 = scalar_lea.sflag [#allocation6], %s352
        %s354 = sand.u32 %s217, 1
        %s355 = smul.addr %s354, 8
        %s356 = scalar_lea.vmem [#allocation5], %s355
        %s357 = smul.u32 32, %s26
        %p358 = scmp.lt.s32.totalorder %s357, 127
        %s359 = scalar_select %p358, %s357, 127
        %s360 = smul.addr %s359, 8
        %s361 = scalar_lea.vmem %s0, %s360
        %s362 = smul.u32 32, %s26
        %s363 = smul.u32 2, %s26
        %s364 = smul.u32 2, %s26
        %v365 = vld [vmem:[%s316] sm:$0xff]
        %v366 = vld [vmem:[%s316 + $0x8] sm:$0xff]
        %v367 = vld [vmem:[%s316 + $0x10] sm:$0x3f]
        %v368 = vld [vmem:[%s316 + $0x18] sm:$0x3f]
        %v369 = vld [vmem:[%s2] sm:$0xff]
        %v370 = vld [vmem:[%s2 + $0x8] sm:$0x3f]
        %v371 = vld [vmem:[%s361] sm:$0xff]
        %v372 = vld [vmem:[%s361 + $0x8] sm:$0xff]
        %v373 = vld [vmem:[%s361 + $0x10] sm:$0xff]
        %v374 = vld [vmem:[%s361 + $0x18] sm:$0xff]
        %v375 = vld [vmem:[%s361 + $0x20] sm:$0xff]
        %v376 = vld [vmem:[%s361 + $0x28] sm:$0xff]
        %v377 = vld [vmem:[%s361 + $0x30] sm:$0xff]
        %v378 = vld [vmem:[%s361 + $0x38] sm:$0xff]
        %v379 = vld [vmem:[%s361 + $0x40] sm:$0xff]
        %v380 = vld [vmem:[%s361 + $0x48] sm:$0xff]
        %v381 = vld [vmem:[%s361 + $0x50] sm:$0xff]
        %v382 = vld [vmem:[%s361 + $0x58] sm:$0xff]
        %v383 = vld [vmem:[%s361 + $0x60] sm:$0xff]
        %v384 = vld [vmem:[%s361 + $0x68] sm:$0xff]
        %v385 = vld [vmem:[%s361 + $0x70] sm:$0xff]
        %v386 = vld [vmem:[%s361 + $0x78] sm:$0xff]
        %v387 = vld [vmem:[%s361 + $0x80] sm:$0xff]
        %v388 = vld [vmem:[%s361 + $0x88] sm:$0xff]
        %v389 = vld [vmem:[%s361 + $0x90] sm:$0xff]
        %v390 = vld [vmem:[%s361 + $0x98] sm:$0xff]
        %v391 = vld [vmem:[%s361 + $0xa0] sm:$0xff]
        %v392 = vld [vmem:[%s361 + $0xa8] sm:$0xff]
        %v393 = vld [vmem:[%s361 + $0xb0] sm:$0xff]
        %v394 = vld [vmem:[%s361 + $0xb8] sm:$0xff]
        %v395 = vld [vmem:[%s361 + $0xc0] sm:$0xff]
        %v396 = vld [vmem:[%s361 + $0xc8] sm:$0xff]
        %v397 = vld [vmem:[%s361 + $0xd0] sm:$0xff]
        %v398 = vld [vmem:[%s361 + $0xd8] sm:$0xff]
        %v399 = vld [vmem:[%s361 + $0xe0] sm:$0xff]
        %v400 = vld [vmem:[%s361 + $0xe8] sm:$0xff]
        %v401 = vld [vmem:[%s361 + $0xf0] sm:$0xff]
        %v402 = vld [vmem:[%s361 + $0xf8] sm:$0xff]
        %vm403 = vcmask 261120
        %v405 = vsel %vm403, %v369, 0
        %v408 = vsel %vm403, %v370, 0
        %v411 = vsel %vm403, %v371, 0
        %v414 = vsel %vm403, %v372, 0
        %v417 = vsel %vm403, %v373, 0
        %v420 = vsel %vm403, %v374, 0
        %v423 = vsel %vm403, %v375, 0
        %v426 = vsel %vm403, %v376, 0
        %v429 = vsel %vm403, %v377, 0
        %v432 = vsel %vm403, %v378, 0
        %v435 = vsel %vm403, %v379, 0
        %v438 = vsel %vm403, %v380, 0
        %v441 = vsel %vm403, %v381, 0
        %v444 = vsel %vm403, %v382, 0
        %v447 = vsel %vm403, %v383, 0
        %v450 = vsel %vm403, %v384, 0
        %v453 = vsel %vm403, %v385, 0
        %v456 = vsel %vm403, %v386, 0
        %v459 = vsel %vm403, %v387, 0
        %v462 = vsel %vm403, %v388, 0
        %v465 = vsel %vm403, %v389, 0
        %v468 = vsel %vm403, %v390, 0
        %v471 = vsel %vm403, %v391, 0
        %v474 = vsel %vm403, %v392, 0
        %v477 = vsel %vm403, %v393, 0
        %v480 = vsel %vm403, %v394, 0
        %v483 = vsel %vm403, %v395, 0
        %v486 = vsel %vm403, %v396, 0
        %v489 = vsel %vm403, %v397, 0
        %v492 = vsel %vm403, %v398, 0
        %v495 = vsel %vm403, %v399, 0
        %v498 = vsel %vm403, %v400, 0
        %v501 = vsel %vm403, %v401, 0
        %v504 = vsel %vm403, %v402, 0
        %506 = vmatprep.subr.mxu0 0.0
        %507 = vmatpush1.xpose.msra.mxu0 %v411
        %508 = vmatprep.subr.mxu0 0.0
        %509 = vmatpush1.xpose.msra.mxu0 %v414
        %510 = vmatprep.subr.mxu0 0.0
        %511 = vmatpush1.xpose.msra.mxu0 %v417
        %512 = vmatprep.subr.mxu0 0.0
        %513 = vmatpush1.xpose.msra.mxu0 %v420
        %514 = vmatprep.subr.mxu0 0.0
        %515 = vmatpush1.xpose.msra.mxu0 %v423
        %516 = vmatprep.subr.mxu0 0.0
        %517 = vmatpush1.xpose.msra.mxu0 %v426
        %518 = vmatprep.subr.mxu0 0.0
        %519 = vmatpush1.xpose.msra.mxu0 %v429
        %520 = vmatprep.subr.mxu0 0.0
        %521 = vmatpush1.xpose.msra.mxu0 %v432
        %522 = vmatprep.subr.mxu0 0.0
        %523 = vmatpush1.xpose.msra.mxu0 %v435
        %524 = vmatprep.subr.mxu0 0.0
        %525 = vmatpush1.xpose.msra.mxu0 %v438
        %526 = vmatprep.subr.mxu0 0.0
        %527 = vmatpush1.xpose.msra.mxu0 %v441
        %528 = vmatprep.subr.mxu0 0.0
        %529 = vmatpush1.xpose.msra.mxu0 %v444
        %530 = vmatprep.subr.mxu0 0.0
        %531 = vmatpush1.xpose.msra.mxu0 %v447
        %532 = vmatprep.subr.mxu0 0.0
        %533 = vmatpush1.xpose.msra.mxu0 %v450
        %534 = vmatprep.subr.mxu0 0.0
        %535 = vmatpush1.xpose.msra.mxu0 %v453
        %536 = vmatprep.subr.mxu0 0.0
        %537 = vmatpush1.xpose.msra.mxu0 %v456
        %538 = vmatprep.subr.mxu0 0.0
        %539 = vmatpush1.xpose.msra.mxu0 %v459
        %540 = vmatprep.subr.mxu0 0.0
        %541 = vmatpush1.xpose.msra.mxu0 %v462
        %542 = vmatprep.subr.mxu0 0.0
        %543 = vmatpush1.xpose.msra.mxu0 %v465
        %544 = vmatprep.subr.mxu0 0.0
        %545 = vmatpush1.xpose.msra.mxu0 %v468
        %546 = vmatprep.subr.mxu0 0.0
        %547 = vmatpush1.xpose.msra.mxu0 %v471
        %548 = vmatprep.subr.mxu0 0.0
        %549 = vmatpush1.xpose.msra.mxu0 %v474
        %550 = vmatprep.subr.mxu0 0.0
        %551 = vmatpush1.xpose.msra.mxu0 %v477
        %552 = vmatprep.subr.mxu0 0.0
        %553 = vmatpush1.xpose.msra.mxu0 %v480
        %554 = vmatprep.subr.mxu0 0.0
        %555 = vmatpush1.xpose.msra.mxu0 %v483
        %556 = vmatprep.subr.mxu0 0.0
        %557 = vmatpush1.xpose.msra.mxu0 %v486
        %558 = vmatprep.subr.mxu0 0.0
        %559 = vmatpush1.xpose.msra.mxu0 %v489
        %560 = vmatprep.subr.mxu0 0.0
        %561 = vmatpush1.xpose.msra.mxu0 %v492
        %562 = vmatprep.subr.mxu0 0.0
        %563 = vmatpush1.xpose.msra.mxu0 %v495
        %564 = vmatprep.subr.mxu0 0.0
        %565 = vmatpush1.xpose.msra.mxu0 %v498
        %566 = vmatprep.subr.mxu0 0.0
        %567 = vmatpush1.xpose.msra.mxu0 %v501
        %568 = vmatprep.subr.mxu0 0.0
        %569 = vmatpush1.xpose.msra.mxu0 %v504
        %570 = vmatprep.mubr.f32.mxu0 0.0
        %571 = vmatmul.mubr.f32.gmra.mrb[0].mxu0 %v405
        %v572 = vpop.f32.mrb[0].mxu0
        %v573 = vadd.f32 0.0, %v572
        %v574 = vpop.f32.mrb[0].mxu0
        %v575 = vadd.f32 0.0, %v574
        %576 = vmatprep.mubr.f32.mxu0 0.0
        %577 = vmatmul.mubr.f32.gmra.mrb[0].mxu0 %v408
        %v578 = vpop.f32.mrb[0].mxu0
        %v579 = vadd.f32 0.0, %v578
        %v580 = vpop.f32.mrb[0].mxu0
        %v581 = vadd.f32 0.0, %v580
        %582 = vdwg.mxu0
        %v583 = vadd.f32 %v573, %v365
        %v584 = vadd.f32 %v575, %v366
        %v585 = vadd.f32 %v579, %v367
        %v586 = vadd.f32 %v581, %v368
        %v587 = vlog2.pop %v583
        %v588 = vmul.f32 %v587, 0.6931472
        %v589 = vlog2.pop %v584
        %v590 = vmul.f32 %v589, 0.6931472
        %v591 = vlog2.pop %v585
        %v592 = vmul.f32 %v591, 0.6931472
        %v593 = vlog2.pop %v586
        %v594 = vmul.f32 %v593, 0.6931472
        %v595 = vlaneseq
        %v596 = vshrl.u32 %v595, 7
        %v597 = vsub.s32 0, %v596
        %v598 = vrot.slane %v588, %v597
        %v599 = vlaneseq
        %v600 = vshrl.u32 %v599, 7
        %v601 = vsub.s32 0, %v600
        %v602 = vrot.slane %v590, %v601
        %vm603 = vcmp.lt.f32.partialorder %v598, %v588
        %vm604 = vcmp.lt.f32.partialorder %v602, %v590
        %vm605 = vcmp.lt.f32.partialorder %v598, %v592
        %vm606 = vcmp.lt.f32.partialorder %v602, %v594
        %v607 = vsel %vm603, 1, 0
        %v608 = vsel %vm604, 1, 0
        %v609 = vsel %vm605, 1, 0
        %v610 = vsel %vm606, 1, 0
        %v611 = vcvt.s32.f32 %v607
        %v612 = vcvt.s32.f32 %v608
        %v613 = vcvt.s32.f32 %v609
        %v614 = vcvt.s32.f32 %v610
        %v615 = vadd.f32 %v611, 0.0
        %v616 = vadd.f32 %v612, 0.0
        %v617 = vadd.f32 %v613, 0.0
        %v618 = vadd.f32 %v614, 0.0
        %v619 = vlaneseq
        %v620 = vshrl.u32 %v619, 7
        %v621 = vsub.s32 1, %v620
        %v622 = vrot.slane %v588, %v621
        %v623 = vlaneseq
        %v624 = vshrl.u32 %v623, 7
        %v625 = vsub.s32 1, %v624
        %v626 = vrot.slane %v590, %v625
        %vm627 = vcmp.lt.f32.partialorder %v622, %v588
        %vm628 = vcmp.lt.f32.partialorder %v626, %v590
        %vm629 = vcmp.lt.f32.partialorder %v622, %v592
        %vm630 = vcmp.lt.f32.partialorder %v626, %v594
        %v631 = vsel %vm627, 1, 0
        %v632 = vsel %vm628, 1, 0
        %v633 = vsel %vm629, 1, 0
        %v634 = vsel %vm630, 1, 0
        %v635 = vcvt.s32.f32 %v631
        %v636 = vcvt.s32.f32 %v632
        %v637 = vcvt.s32.f32 %v633
        %v638 = vcvt.s32.f32 %v634
        %v639 = vadd.f32 %v615, %v635
        %v640 = vadd.f32 %v616, %v636
        %v641 = vadd.f32 %v617, %v637
        %v642 = vadd.f32 %v618, %v638
        %v643 = vlaneseq
        %v644 = vshrl.u32 %v643, 7
        %v645 = vsub.s32 2, %v644
        %v646 = vrot.slane %v588, %v645
        %v647 = vlaneseq
        %v648 = vshrl.u32 %v647, 7
        %v649 = vsub.s32 2, %v648
        %v650 = vrot.slane %v590, %v649
        %vm651 = vcmp.lt.f32.partialorder %v646, %v588
        %vm652 = vcmp.lt.f32.partialorder %v650, %v590
        %vm653 = vcmp.lt.f32.partialorder %v646, %v592
        %vm654 = vcmp.lt.f32.partialorder %v650, %v594
        %v655 = vsel %vm651, 1, 0
        %v656 = vsel %vm652, 1, 0
        %v657 = vsel %vm653, 1, 0
        %v658 = vsel %vm654, 1, 0
        %v659 = vcvt.s32.f32 %v655
        %v660 = vcvt.s32.f32 %v656
        %v661 = vcvt.s32.f32 %v657
        %v662 = vcvt.s32.f32 %v658
        %v663 = vadd.f32 %v639, %v659
        %v664 = vadd.f32 %v640, %v660
        %v665 = vadd.f32 %v641, %v661
        %v666 = vadd.f32 %v642, %v662
        %v667 = vlaneseq
        %v668 = vshrl.u32 %v667, 7
        %v669 = vsub.s32 3, %v668
        %v670 = vrot.slane %v588, %v669
        %v671 = vlaneseq
        %v672 = vshrl.u32 %v671, 7
        %v673 = vsub.s32 3, %v672
        %v674 = vrot.slane %v590, %v673
        %vm675 = vcmp.lt.f32.partialorder %v670, %v588
        %vm676 = vcmp.lt.f32.partialorder %v674, %v590
        %vm677 = vcmp.lt.f32.partialorder %v670, %v592
        %vm678 = vcmp.lt.f32.partialorder %v674, %v594
        %v679 = vsel %vm675, 1, 0
        %v680 = vsel %vm676, 1, 0
        %v681 = vsel %vm677, 1, 0
        %v682 = vsel %vm678, 1, 0
        %v683 = vcvt.s32.f32 %v679
        %v684 = vcvt.s32.f32 %v680
        %v685 = vcvt.s32.f32 %v681
        %v686 = vcvt.s32.f32 %v682
        %v687 = vadd.f32 %v663, %v683
        %v688 = vadd.f32 %v664, %v684
        %v689 = vadd.f32 %v665, %v685
        %v690 = vadd.f32 %v666, %v686
        %v691 = vlaneseq
        %v692 = vshrl.u32 %v691, 7
        %v693 = vsub.s32 4, %v692
        %v694 = vrot.slane %v588, %v693
        %v695 = vlaneseq
        %v696 = vshrl.u32 %v695, 7
        %v697 = vsub.s32 4, %v696
        %v698 = vrot.slane %v590, %v697
        %vm699 = vcmp.lt.f32.partialorder %v694, %v588
        %vm700 = vcmp.lt.f32.partialorder %v698, %v590
        %vm701 = vcmp.lt.f32.partialorder %v694, %v592
        %vm702 = vcmp.lt.f32.partialorder %v698, %v594
        %v703 = vsel %vm699, 1, 0
        %v704 = vsel %vm700, 1, 0
        %v705 = vsel %vm701, 1, 0
        %v706 = vsel %vm702, 1, 0
        %v707 = vcvt.s32.f32 %v703
        %v708 = vcvt.s32.f32 %v704
        %v709 = vcvt.s32.f32 %v705
        %v710 = vcvt.s32.f32 %v706
        %v711 = vadd.f32 %v687, %v707
        %v712 = vadd.f32 %v688, %v708
        %v713 = vadd.f32 %v689, %v709
        %v714 = vadd.f32 %v690, %v710
        %v715 = vlaneseq
        %v716 = vshrl.u32 %v715, 7
        %v717 = vsub.s32 5, %v716
        %v718 = vrot.slane %v588, %v717
        %v719 = vlaneseq
        %v720 = vshrl.u32 %v719, 7
        %v721 = vsub.s32 5, %v720
        %v722 = vrot.slane %v590, %v721
        %vm723 = vcmp.lt.f32.partialorder %v718, %v588
        %vm724 = vcmp.lt.f32.partialorder %v722, %v590
        %vm725 = vcmp.lt.f32.partialorder %v718, %v592
        %vm726 = vcmp.lt.f32.partialorder %v722, %v594
        %v727 = vsel %vm723, 1, 0
        %v728 = vsel %vm724, 1, 0
        %v729 = vsel %vm725, 1, 0
        %v730 = vsel %vm726, 1, 0
        %v731 = vcvt.s32.f32 %v727
        %v732 = vcvt.s32.f32 %v728
        %v733 = vcvt.s32.f32 %v729
        %v734 = vcvt.s32.f32 %v730
        %v735 = vadd.f32 %v711, %v731
        %v736 = vadd.f32 %v712, %v732
        %v737 = vadd.f32 %v713, %v733
        %v738 = vadd.f32 %v714, %v734
        %v739 = vlaneseq
        %v740 = vshrl.u32 %v739, 7
        %v741 = vsub.s32 6, %v740
        %v742 = vrot.slane %v588, %v741
        %v743 = vlaneseq
        %v744 = vshrl.u32 %v743, 7
        %v745 = vsub.s32 6, %v744
        %v746 = vrot.slane %v590, %v745
        %vm747 = vcmp.lt.f32.partialorder %v742, %v588
        %vm748 = vcmp.lt.f32.partialorder %v746, %v590
        %vm749 = vcmp.lt.f32.partialorder %v742, %v592
        %vm750 = vcmp.lt.f32.partialorder %v746, %v594
        %v751 = vsel %vm747, 1, 0
        %v752 = vsel %vm748, 1, 0
        %v753 = vsel %vm749, 1, 0
        %v754 = vsel %vm750, 1, 0
        %v755 = vcvt.s32.f32 %v751
        %v756 = vcvt.s32.f32 %v752
        %v757 = vcvt.s32.f32 %v753
        %v758 = vcvt.s32.f32 %v754
        %v759 = vadd.f32 %v735, %v755
        %v760 = vadd.f32 %v736, %v756
        %v761 = vadd.f32 %v737, %v757
        %v762 = vadd.f32 %v738, %v758
        %v763 = vlaneseq
        %v764 = vshrl.u32 %v763, 7
        %v765 = vsub.s32 7, %v764
        %v766 = vrot.slane %v588, %v765
        %v767 = vlaneseq
        %v768 = vshrl.u32 %v767, 7
        %v769 = vsub.s32 7, %v768
        %v770 = vrot.slane %v590, %v769
        %vm771 = vcmp.lt.f32.partialorder %v766, %v588
        %vm772 = vcmp.lt.f32.partialorder %v770, %v590
        %vm773 = vcmp.lt.f32.partialorder %v766, %v592
        %vm774 = vcmp.lt.f32.partialorder %v770, %v594
        %v775 = vsel %vm771, 1, 0
        %v776 = vsel %vm772, 1, 0
        %v777 = vsel %vm773, 1, 0
        %v778 = vsel %vm774, 1, 0
        %v779 = vcvt.s32.f32 %v775
        %v780 = vcvt.s32.f32 %v776
        %v781 = vcvt.s32.f32 %v777
        %v782 = vcvt.s32.f32 %v778
        %v783 = vadd.f32 %v759, %v779
        %v784 = vadd.f32 %v760, %v780
        %v785 = vadd.f32 %v761, %v781
        %v786 = vadd.f32 %v762, %v782
        %v787 = vlaneseq
        %v788 = vshrl.u32 %v787, 7
        %v789 = vsub.s32 0, %v788
        %v790 = vrot.slane %v592, %v789
        %v791 = vlaneseq
        %v792 = vshrl.u32 %v791, 7
        %v793 = vsub.s32 0, %v792
        %v794 = vrot.slane %v594, %v793
        %vm795 = vcmp.lt.f32.partialorder %v790, %v588
        %vm796 = vcmp.lt.f32.partialorder %v794, %v590
        %vm797 = vcmp.lt.f32.partialorder %v790, %v592
        %vm798 = vcmp.lt.f32.partialorder %v794, %v594
        %v799 = vsel %vm795, 1, 0
        %v800 = vsel %vm796, 1, 0
        %v801 = vsel %vm797, 1, 0
        %v802 = vsel %vm798, 1, 0
        %v803 = vcvt.s32.f32 %v799
        %v804 = vcvt.s32.f32 %v800
        %v805 = vcvt.s32.f32 %v801
        %v806 = vcvt.s32.f32 %v802
        %v807 = vadd.f32 %v783, %v803
        %v808 = vadd.f32 %v784, %v804
        %v809 = vadd.f32 %v785, %v805
        %v810 = vadd.f32 %v786, %v806
        %v811 = vlaneseq
        %v812 = vshrl.u32 %v811, 7
        %v813 = vsub.s32 1, %v812
        %v814 = vrot.slane %v592, %v813
        %v815 = vlaneseq
        %v816 = vshrl.u32 %v815, 7
        %v817 = vsub.s32 1, %v816
        %v818 = vrot.slane %v594, %v817
        %vm819 = vcmp.lt.f32.partialorder %v814, %v588
        %vm820 = vcmp.lt.f32.partialorder %v818, %v590
        %vm821 = vcmp.lt.f32.partialorder %v814, %v592
        %vm822 = vcmp.lt.f32.partialorder %v818, %v594
        %v823 = vsel %vm819, 1, 0
        %v824 = vsel %vm820, 1, 0
        %v825 = vsel %vm821, 1, 0
        %v826 = vsel %vm822, 1, 0
        %v827 = vcvt.s32.f32 %v823
        %v828 = vcvt.s32.f32 %v824
        %v829 = vcvt.s32.f32 %v825
        %v830 = vcvt.s32.f32 %v826
        %v831 = vadd.f32 %v807, %v827
        %v832 = vadd.f32 %v808, %v828
        %v833 = vadd.f32 %v809, %v829
        %v834 = vadd.f32 %v810, %v830
        %v835 = vlaneseq
        %v836 = vshrl.u32 %v835, 7
        %v837 = vsub.s32 2, %v836
        %v838 = vrot.slane %v592, %v837
        %v839 = vlaneseq
        %v840 = vshrl.u32 %v839, 7
        %v841 = vsub.s32 2, %v840
        %v842 = vrot.slane %v594, %v841
        %vm843 = vcmp.lt.f32.partialorder %v838, %v588
        %vm844 = vcmp.lt.f32.partialorder %v842, %v590
        %vm845 = vcmp.lt.f32.partialorder %v838, %v592
        %vm846 = vcmp.lt.f32.partialorder %v842, %v594
        %v847 = vsel %vm843, 1, 0
        %v848 = vsel %vm844, 1, 0
        %v849 = vsel %vm845, 1, 0
        %v850 = vsel %vm846, 1, 0
        %v851 = vcvt.s32.f32 %v847
        %v852 = vcvt.s32.f32 %v848
        %v853 = vcvt.s32.f32 %v849
        %v854 = vcvt.s32.f32 %v850
        %v855 = vadd.f32 %v831, %v851
        %v856 = vadd.f32 %v832, %v852
        %v857 = vadd.f32 %v833, %v853
        %v858 = vadd.f32 %v834, %v854
        %v859 = vlaneseq
        %v860 = vshrl.u32 %v859, 7
        %v861 = vsub.s32 3, %v860
        %v862 = vrot.slane %v592, %v861
        %v863 = vlaneseq
        %v864 = vshrl.u32 %v863, 7
        %v865 = vsub.s32 3, %v864
        %v866 = vrot.slane %v594, %v865
        %vm867 = vcmp.lt.f32.partialorder %v862, %v588
        %vm868 = vcmp.lt.f32.partialorder %v866, %v590
        %vm869 = vcmp.lt.f32.partialorder %v862, %v592
        %vm870 = vcmp.lt.f32.partialorder %v866, %v594
        %v871 = vsel %vm867, 1, 0
        %v872 = vsel %vm868, 1, 0
        %v873 = vsel %vm869, 1, 0
        %v874 = vsel %vm870, 1, 0
        %v875 = vcvt.s32.f32 %v871
        %v876 = vcvt.s32.f32 %v872
        %v877 = vcvt.s32.f32 %v873
        %v878 = vcvt.s32.f32 %v874
        %v879 = vadd.f32 %v855, %v875
        %v880 = vadd.f32 %v856, %v876
        %v881 = vadd.f32 %v857, %v877
        %v882 = vadd.f32 %v858, %v878
        %v883 = vlaneseq
        %v884 = vshrl.u32 %v883, 7
        %v885 = vsub.s32 4, %v884
        %v886 = vrot.slane %v592, %v885
        %v887 = vlaneseq
        %v888 = vshrl.u32 %v887, 7
        %v889 = vsub.s32 4, %v888
        %v890 = vrot.slane %v594, %v889
        %vm891 = vcmp.lt.f32.partialorder %v886, %v588
        %vm892 = vcmp.lt.f32.partialorder %v890, %v590
        %vm893 = vcmp.lt.f32.partialorder %v886, %v592
        %vm894 = vcmp.lt.f32.partialorder %v890, %v594
        %v895 = vsel %vm891, 1, 0
        %v896 = vsel %vm892, 1, 0
        %v897 = vsel %vm893, 1, 0
        %v898 = vsel %vm894, 1, 0
        %v899 = vcvt.s32.f32 %v895
        %v900 = vcvt.s32.f32 %v896
        %v901 = vcvt.s32.f32 %v897
        %v902 = vcvt.s32.f32 %v898
        %v903 = vadd.f32 %v879, %v899
        %v904 = vadd.f32 %v880, %v900
        %v905 = vadd.f32 %v881, %v901
        %v906 = vadd.f32 %v882, %v902
        %v907 = vlaneseq
        %v908 = vshrl.u32 %v907, 7
        %v909 = vsub.s32 5, %v908
        %v910 = vrot.slane %v592, %v909
        %v911 = vlaneseq
        %v912 = vshrl.u32 %v911, 7
        %v913 = vsub.s32 5, %v912
        %v914 = vrot.slane %v594, %v913
        %vm915 = vcmp.lt.f32.partialorder %v910, %v588
        %vm916 = vcmp.lt.f32.partialorder %v914, %v590
        %vm917 = vcmp.lt.f32.partialorder %v910, %v592
        %vm918 = vcmp.lt.f32.partialorder %v914, %v594
        %v919 = vsel %vm915, 1, 0
        %v920 = vsel %vm916, 1, 0
        %v921 = vsel %vm917, 1, 0
        %v922 = vsel %vm918, 1, 0
        %v923 = vcvt.s32.f32 %v919
        %v924 = vcvt.s32.f32 %v920
        %v925 = vcvt.s32.f32 %v921
        %v926 = vcvt.s32.f32 %v922
        %v927 = vadd.f32 %v903, %v923
        %v928 = vadd.f32 %v904, %v924
        %v929 = vadd.f32 %v905, %v925
        %v930 = vadd.f32 %v906, %v926
        %vm931 = vcmp.le.f32.partialorder %v927, 6.0
        %vm932 = vcmp.le.f32.partialorder %v928, 6.0
        %vm933 = vcmp.le.f32.partialorder %v929, 6.0
        %vm934 = vcmp.le.f32.partialorder %v930, 6.0
        %vm935 = vcmp.le.f32.partialorder %v927, 7.0
        %vm936 = vcmp.le.f32.partialorder %v928, 7.0
        %vm937 = vcmp.le.f32.partialorder %v929, 7.0
        %vm938 = vcmp.le.f32.partialorder %v930, 7.0
        %v939 = vsel %vm931, %v588, -3e+38
        %v940 = vsel %vm932, %v590, -3e+38
        %v941 = vsel %vm933, %v592, -3e+38
        %v942 = vsel %vm934, %v594, -3e+38
        %vm943 = vcmask 1045504
        %v944 = vsel %vm943, %v941, -inf
        %v945 = vmax.f32 %v939, %v944
        %v946 = vrot.slane %v945, 4
        %v947 = vmax.f32 %v945, %v946
        %v948 = vrot.slane %v947, 2
        %v949 = vmax.f32 %v947, %v948
        %v950 = vrot.slane %v949, 1
        %v951 = vmax.f32 %v949, %v950
        %v952 = vsel %vm943, %v942, -inf
        %v953 = vmax.f32 %v940, %v952
        %v954 = vrot.slane %v953, 4
        %v955 = vmax.f32 %v953, %v954
        %v956 = vrot.slane %v955, 2
        %v957 = vmax.f32 %v955, %v956
        %v958 = vrot.slane %v957, 1
        %v959 = vmax.f32 %v957, %v958
        %v960 = vsel %vm935, %v588, -3e+38
        %v961 = vsel %vm936, %v590, -3e+38
        %v962 = vsel %vm937, %v592, -3e+38
        %v963 = vsel %vm938, %v594, -3e+38
        %v964 = vsel %vm943, %v962, -inf
        %v965 = vmax.f32 %v960, %v964
        %v966 = vrot.slane %v965, 4
        %v967 = vmax.f32 %v965, %v966
        %v968 = vrot.slane %v967, 2
        %v969 = vmax.f32 %v967, %v968
        %v970 = vrot.slane %v969, 1
        %v971 = vmax.f32 %v969, %v970
        %v972 = vsel %vm943, %v963, -inf
        %v973 = vmax.f32 %v961, %v972
        %v974 = vrot.slane %v973, 4
        %v975 = vmax.f32 %v973, %v974
        %v976 = vrot.slane %v975, 2
        %v977 = vmax.f32 %v975, %v976
        %v978 = vrot.slane %v977, 1
        %v979 = vmax.f32 %v977, %v978
        %v980 = vadd.f32 %v951, %v971
        %v981 = vadd.f32 %v959, %v979
        %v982 = vmul.f32 %v980, 0.5
        %v983 = vmul.f32 %v981, 0.5
        %v984 = vsub.f32 %v588, %v982
        %v985 = vsub.f32 %v590, %v983
        %v986 = vsub.f32 %v592, %v982
        %v987 = vsub.f32 %v594, %v983
        %v988 = vmul.f32 %v984, 0.10399545
        %v989 = vmul.f32 %v985, 0.10399545
        %v990 = vmul.f32 %v986, 0.10399545
        %v991 = vmul.f32 %v987, 0.10399545
        %v992 = vtanh.pop %v988
        %v993 = vtanh.pop %v989
        %v994 = vtanh.pop %v990
        %v995 = vtanh.pop %v991
        %v996 = vld [vmem:[%s3] sm:$0xff]
        %v997 = vld [vmem:[%s3 + $0x8] sm:$0x3f]
        %v998 = vld [vmem:[%s4] sm:$0xff]
        %v999 = vld [vmem:[%s4 + $0x8] sm:$0x3f]
        %1001 = vset.pattern.permute.xlu0 0
        %1002 = vperm.xlu0 %1001, %v998
        %v1003 = vpop.permute.xlu0 %1002
        %1006 = vset.pattern.permute.xlu0 0
        %1007 = vperm.xlu0 %1006, %v999
        %v1008 = vpop.permute.xlu0 %1007
        %vm1010 = vcmask 113664
        %v1012 = vsel %vm1010, %v996, 0
        %v1015 = vsel %vm1010, %v997, 0
        %v1018 = vsel %vm943, %v994, 0
        %v1021 = vsel %vm943, %v995, 0
        %1023 = vmatprep.subr.mxu0 %v993
        %1024 = vmatpush1.msra.mxu0 %v992
        %1025 = vmatprep.subr.mxu0 %v1021
        %1026 = vmatpush1.msra.mxu0 %v1018
        %1027 = vmatprep.subr.mxu0 0.0
        %1028 = vmatpush1.msra.mxu0 0.0
        %1029 = vmatprep.subr.mxu0 0.0
        %1030 = vmatpush1.msra.mxu0 0.0
        %1031 = vmatprep.subr.mxu0 0.0
        %1032 = vmatpush1.msra.mxu0 0.0
        %1033 = vmatprep.subr.mxu0 0.0
        %1034 = vmatpush1.msra.mxu0 0.0
        %1035 = vmatprep.subr.mxu0 0.0
        %1036 = vmatpush1.msra.mxu0 0.0
        %1037 = vmatprep.subr.mxu0 0.0
        %1038 = vmatpush1.msra.mxu0 0.0
        %1039 = vmatprep.subr.mxu0 0.0
        %1040 = vmatpush1.msra.mxu0 0.0
        %1041 = vmatprep.subr.mxu0 0.0
        %1042 = vmatpush1.msra.mxu0 0.0
        %1043 = vmatprep.subr.mxu0 0.0
        %1044 = vmatpush1.msra.mxu0 0.0
        %1045 = vmatprep.subr.mxu0 0.0
        %1046 = vmatpush1.msra.mxu0 0.0
        %1047 = vmatprep.subr.mxu0 0.0
        %1048 = vmatpush1.msra.mxu0 0.0
        %1049 = vmatprep.subr.mxu0 0.0
        %1050 = vmatpush1.msra.mxu0 0.0
        %1051 = vmatprep.subr.mxu0 0.0
        %1052 = vmatpush1.msra.mxu0 0.0
        %1053 = vmatprep.subr.mxu0 0.0
        %1054 = vmatpush1.msra.mxu0 0.0
        %1055 = vmatprep.subr.mxu0 0.0
        %1056 = vmatpush1.msra.mxu0 0.0
        %1057 = vmatprep.subr.mxu0 0.0
        %1058 = vmatpush1.msra.mxu0 0.0
        %1059 = vmatprep.subr.mxu0 0.0
        %1060 = vmatpush1.msra.mxu0 0.0
        %1061 = vmatprep.subr.mxu0 0.0
        %1062 = vmatpush1.msra.mxu0 0.0
        %1063 = vmatprep.subr.mxu0 0.0
        %1064 = vmatpush1.msra.mxu0 0.0
        %1065 = vmatprep.subr.mxu0 0.0
        %1066 = vmatpush1.msra.mxu0 0.0
        %1067 = vmatprep.subr.mxu0 0.0
        %1068 = vmatpush1.msra.mxu0 0.0
        %1069 = vmatprep.subr.mxu0 0.0
        %1070 = vmatpush1.msra.mxu0 0.0
        %1071 = vmatprep.subr.mxu0 0.0
        %1072 = vmatpush1.msra.mxu0 0.0
        %1073 = vmatprep.subr.mxu0 0.0
        %1074 = vmatpush1.msra.mxu0 0.0
        %1075 = vmatprep.subr.mxu0 0.0
        %1076 = vmatpush1.msra.mxu0 0.0
        %1077 = vmatprep.subr.mxu0 0.0
        %1078 = vmatpush1.msra.mxu0 0.0
        %1079 = vmatprep.subr.mxu0 0.0
        %1080 = vmatpush1.msra.mxu0 0.0
        %1081 = vmatprep.subr.mxu0 0.0
        %1082 = vmatpush1.msra.mxu0 0.0
        %1083 = vmatprep.subr.mxu0 0.0
        %1084 = vmatpush1.msra.mxu0 0.0
        %1085 = vmatprep.subr.mxu0 0.0
        %1086 = vmatpush1.msra.mxu0 0.0
        %1087 = vmatprep.mubr.f32.mxu0 0.0
        %1088 = vmatmul.mubr.f32.gmra.mrb[0].mxu0 %v1012
        %v1089 = vpop.f32.mrb[0].mxu0
        %v1090 = vadd.f32 %v1003, %v1089
        %v1091 = vpop.f32.mrb[0].mxu0
        %v1092 = vadd.f32 %v1003, %v1091
        %1093 = vmatprep.mubr.f32.mxu0 0.0
        %1094 = vmatmul.mubr.f32.gmra.mrb[0].mxu0 %v1015
        %v1095 = vpop.f32.mrb[0].mxu0
        %v1096 = vadd.f32 %v1008, %v1095
        %v1097 = vpop.f32.mrb[0].mxu0
        %v1098 = vadd.f32 %v1008, %v1097
        %1099 = vdwg.mxu0
        %v1100 = vmax.f32 %v1090, 0.0
        %v1101 = vmax.f32 %v1092, 0.0
        %v1102 = vmax.f32 %v1096, 0.0
        %v1103 = vmax.f32 %v1098, 0.0
        %v1104 = vld [vmem:[%s5] sm:$0xff]
        %v1105 = vld [vmem:[%s5 + $0x8] sm:$0xff]
        %v1106 = vld [vmem:[%s6] sm:$0xff]
        %v1107 = vld [vmem:[%s6 + $0x8] sm:$0xff]
        %1109 = vset.pattern.permute.xlu0 0
        %1110 = vperm.xlu0 %1109, %v1106
        %v1111 = vpop.permute.xlu0 %1110
        %1114 = vset.pattern.permute.xlu0 0
        %1115 = vperm.xlu0 %1114, %v1107
        %v1116 = vpop.permute.xlu0 %1115
        %v1119 = vsel %vm1010, %v1104, 0
        %v1122 = vsel %vm1010, %v1105, 0
        %v1125 = vsel %vm943, %v1102, 0
        %v1128 = vsel %vm943, %v1103, 0
        %1130 = vmatprep.subr.mxu0 %v1101
        %1131 = vmatpush1.msra.mxu0 %v1100
        %1132 = vmatprep.subr.mxu0 %v1128
        %1133 = vmatpush1.msra.mxu0 %v1125
        %1134 = vmatprep.subr.mxu0 0.0
        %1135 = vmatpush1.msra.mxu0 0.0
        %1136 = vmatprep.subr.mxu0 0.0
        %1137 = vmatpush1.msra.mxu0 0.0
        %1138 = vmatprep.subr.mxu0 0.0
        %1139 = vmatpush1.msra.mxu0 0.0
        %1140 = vmatprep.subr.mxu0 0.0
        %1141 = vmatpush1.msra.mxu0 0.0
        %1142 = vmatprep.subr.mxu0 0.0
        %1143 = vmatpush1.msra.mxu0 0.0
        %1144 = vmatprep.subr.mxu0 0.0
        %1145 = vmatpush1.msra.mxu0 0.0
        %1146 = vmatprep.subr.mxu0 0.0
        %1147 = vmatpush1.msra.mxu0 0.0
        %1148 = vmatprep.subr.mxu0 0.0
        %1149 = vmatpush1.msra.mxu0 0.0
        %1150 = vmatprep.subr.mxu0 0.0
        %1151 = vmatpush1.msra.mxu0 0.0
        %1152 = vmatprep.subr.mxu0 0.0
        %1153 = vmatpush1.msra.mxu0 0.0
        %1154 = vmatprep.subr.mxu0 0.0
        %1155 = vmatpush1.msra.mxu0 0.0
        %1156 = vmatprep.subr.mxu0 0.0
        %1157 = vmatpush1.msra.mxu0 0.0
        %1158 = vmatprep.subr.mxu0 0.0
        %1159 = vmatpush1.msra.mxu0 0.0
        %1160 = vmatprep.subr.mxu0 0.0
        %1161 = vmatpush1.msra.mxu0 0.0
        %1162 = vmatprep.subr.mxu0 0.0
        %1163 = vmatpush1.msra.mxu0 0.0
        %1164 = vmatprep.subr.mxu0 0.0
        %1165 = vmatpush1.msra.mxu0 0.0
        %1166 = vmatprep.subr.mxu0 0.0
        %1167 = vmatpush1.msra.mxu0 0.0
        %1168 = vmatprep.subr.mxu0 0.0
        %1169 = vmatpush1.msra.mxu0 0.0
        %1170 = vmatprep.subr.mxu0 0.0
        %1171 = vmatpush1.msra.mxu0 0.0
        %1172 = vmatprep.subr.mxu0 0.0
        %1173 = vmatpush1.msra.mxu0 0.0
        %1174 = vmatprep.subr.mxu0 0.0
        %1175 = vmatpush1.msra.mxu0 0.0
        %1176 = vmatprep.subr.mxu0 0.0
        %1177 = vmatpush1.msra.mxu0 0.0
        %1178 = vmatprep.subr.mxu0 0.0
        %1179 = vmatpush1.msra.mxu0 0.0
        %1180 = vmatprep.subr.mxu0 0.0
        %1181 = vmatpush1.msra.mxu0 0.0
        %1182 = vmatprep.subr.mxu0 0.0
        %1183 = vmatpush1.msra.mxu0 0.0
        %1184 = vmatprep.subr.mxu0 0.0
        %1185 = vmatpush1.msra.mxu0 0.0
        %1186 = vmatprep.subr.mxu0 0.0
        %1187 = vmatpush1.msra.mxu0 0.0
        %1188 = vmatprep.subr.mxu0 0.0
        %1189 = vmatpush1.msra.mxu0 0.0
        %1190 = vmatprep.subr.mxu0 0.0
        %1191 = vmatpush1.msra.mxu0 0.0
        %1192 = vmatprep.subr.mxu0 0.0
        %1193 = vmatpush1.msra.mxu0 0.0
        %1194 = vmatprep.mubr.f32.mxu0 0.0
        %1195 = vmatmul.mubr.f32.gmra.mrb[0].mxu0 %v1119
        %v1196 = vpop.f32.mrb[0].mxu0
        %v1197 = vadd.f32 %v1111, %v1196
        %v1198 = vpop.f32.mrb[0].mxu0
        %v1199 = vadd.f32 %v1111, %v1198
        %1200 = vmatprep.mubr.f32.mxu0 0.0
        %1201 = vmatmul.mubr.f32.gmra.mrb[0].mxu0 %v1122
        %v1202 = vpop.f32.mrb[0].mxu0
        %v1203 = vadd.f32 %v1116, %v1202
        %v1204 = vpop.f32.mrb[0].mxu0
        %v1205 = vadd.f32 %v1116, %v1204
        %1206 = vdwg.mxu0
        %v1207 = vmax.f32 %v1197, 0.0
        %v1208 = vmax.f32 %v1199, 0.0
        %v1209 = vmax.f32 %v1203, 0.0
        %v1210 = vmax.f32 %v1205, 0.0
        %1211 = vst [vmem:[%s349] sm:$0xff] %v1207
        %1212 = vst [vmem:[%s349 + $0x8] sm:$0xff] %v1208
        %1213 = vst [vmem:[%s349 + $0x10] sm:$0xff] %v1209
        %1214 = vst [vmem:[%s349 + $0x18] sm:$0xff] %v1210
        %1215 = vst [vmem:[%s349 + $0x20] sm:$0xff] %v992
        %1216 = vst [vmem:[%s349 + $0x28] sm:$0xff] %v993
        %1217 = vst [vmem:[%s349 + $0x30] sm:$0x3f] %v994
        %1218 = vst [vmem:[%s349 + $0x38] sm:$0x3f] %v995
        %v1219 = vlaneseq
        %v1220 = vand.u32 %v1219, 127
        %v1221 = vadd.s32 %v1220, 128
        %s1222 = smul.u32 %s26, 256
        %v1223 = vstv %s1222
        %v1224 = vadd.s32 %v1220, %v1223
        %v1225 = vadd.s32 %v1221, %v1223
        %vm1226 = vcmp.lt.s32.totalorder %v1224, 1000
        %vm1227 = vcmp.lt.s32.totalorder %v1225, 1000
        %v1228 = vsel %vm1226, 1, 0
        %v1229 = vsel %vm1227, 1, 0
        %v1230 = vcvt.s32.f32 %v1228
        %v1231 = vcvt.s32.f32 %v1229
        %v1232 = vsub.f32 50000.0, %v573
        %v1233 = vsub.f32 50000.0, %v575
        %v1234 = vsub.f32 50000.0, %v579
        %v1235 = vsub.f32 50000.0, %v581
        %v1236 = vmax.f32 %v1232, 0.0
        %v1237 = vmax.f32 %v1233, 0.0
        %v1238 = vmax.f32 %v1234, 0.0
        %v1239 = vmax.f32 %v1235, 0.0
        %v1240 = vmul.f32 %v1236, %v1236
        %v1241 = vmul.f32 %v1237, %v1237
        %v1242 = vmul.f32 %v1238, %v1238
        %v1243 = vmul.f32 %v1239, %v1239
        %v1244 = vmul.f32 %v1240, %v1230
        %v1245 = vmul.f32 %v1241, %v1231
        %v1246 = vmul.f32 %v1242, %v1230
        %v1247 = vmul.f32 %v1243, %v1231
        %v1248 = vadd.f32 %v1244, %v1245
        %v1249 = vsel %vm943, %v1246, 0.0
        %v1250 = vadd.f32 %v1248, %v1249
        %v1251 = vsel %vm943, %v1247, 0.0
        %v1252 = vadd.f32 %v1250, %v1251
        %1253 = vadd.xlane.f32.xlu0 %v1252
        %v1254 = vpop.xlane.xlu0 %1253
        %v1255 = vrot.slane %v1254, 4
        %v1256 = vadd.f32 %v1254, %v1255
        %v1257 = vrot.slane %v1256, 2
        %v1258 = vadd.f32 %v1256, %v1257
        %v1259 = vrot.slane %v1258, 1
        %v1260 = vadd.f32 %v1258, %v1259
        %s1261 = vtos %v1260
        %v1262 = vsub.f32 %v573, 250000.0
        %v1263 = vsub.f32 %v575, 250000.0
        %v1264 = vsub.f32 %v579, 250000.0
        %v1265 = vsub.f32 %v581, 250000.0
        %v1266 = vmax.f32 %v1262, 0.0
        %v1267 = vmax.f32 %v1263, 0.0
        %v1268 = vmax.f32 %v1264, 0.0
        %v1269 = vmax.f32 %v1265, 0.0
        %v1270 = vmul.f32 %v1266, %v1266
        %v1271 = vmul.f32 %v1267, %v1267
        %v1272 = vmul.f32 %v1268, %v1268
        %v1273 = vmul.f32 %v1269, %v1269
        %v1274 = vmul.f32 %v1270, %v1230
        %v1275 = vmul.f32 %v1271, %v1231
        %v1276 = vmul.f32 %v1272, %v1230
        %v1277 = vmul.f32 %v1273, %v1231
        %v1278 = vadd.f32 %v1274, %v1275
        %v1279 = vsel %vm943, %v1276, 0.0
        %v1280 = vadd.f32 %v1278, %v1279
        %v1281 = vsel %vm943, %v1277, 0.0
        %v1282 = vadd.f32 %v1280, %v1281
        %1283 = vadd.xlane.f32.xlu0 %v1282
        %v1284 = vpop.xlane.xlu0 %1283
        %v1285 = vrot.slane %v1284, 4
        %v1286 = vadd.f32 %v1284, %v1285
        %v1287 = vrot.slane %v1286, 2
        %v1288 = vadd.f32 %v1286, %v1287
        %v1289 = vrot.slane %v1288, 1
        %v1290 = vadd.f32 %v1288, %v1289
        %s1291 = vtos %v1290
        %v1292 = vsel %vm935, %v583, -1.0
        %v1293 = vsel %vm936, %v584, -1.0
        %v1294 = vsel %vm937, %v585, -1.0
        %v1295 = vsel %vm938, %v586, -1.0
        %v1296 = vsel %vm943, %v1294, -inf
        %v1297 = vmax.f32 %v1292, %v1296
        %v1298 = vrot.slane %v1297, 4
        %v1299 = vmax.f32 %v1297, %v1298
        %v1300 = vrot.slane %v1299, 2
        %v1301 = vmax.f32 %v1299, %v1300
        %v1302 = vrot.slane %v1301, 1
        %v1303 = vmax.f32 %v1301, %v1302
        %v1304 = vsel %vm943, %v1295, -inf
        %v1305 = vmax.f32 %v1293, %v1304
        %v1306 = vrot.slane %v1305, 4
        %v1307 = vmax.f32 %v1305, %v1306
        %v1308 = vrot.slane %v1307, 2
        %v1309 = vmax.f32 %v1307, %v1308
        %v1310 = vrot.slane %v1309, 1
        %v1311 = vmax.f32 %v1309, %v1310
        %v1312 = vsub.f32 100000.0, %v583
        %v1313 = vsub.f32 100000.0, %v584
        %v1314 = vsub.f32 100000.0, %v585
        %v1315 = vsub.f32 100000.0, %v586
        %v1316 = vmax.f32 %v1312, 0.0
        %v1317 = vmax.f32 %v1313, 0.0
        %v1318 = vmax.f32 %v1314, 0.0
        %v1319 = vmax.f32 %v1315, 0.0
        %v1320 = vmul.f32 %v1316, %v1316
        %v1321 = vmul.f32 %v1317, %v1317
        %v1322 = vmul.f32 %v1318, %v1318
        %v1323 = vmul.f32 %v1319, %v1319
        %vm1324 = vcmp.gt.f32.partialorder %v588, %v971
        %vm1325 = vcmp.gt.f32.partialorder %v590, %v979
        %vm1326 = vcmp.gt.f32.partialorder %v592, %v971
        %vm1327 = vcmp.gt.f32.partialorder %v594, %v979
        %v1328 = vsel %vm1324, 1, 0
        %v1329 = vsel %vm1325, 1, 0
        %v1330 = vsel %vm1326, 1, 0
        %v1331 = vsel %vm1327, 1, 0
        %v1332 = vcvt.s32.f32 %v1328
        %v1333 = vcvt.s32.f32 %v1329
        %v1334 = vcvt.s32.f32 %v1330
        %v1335 = vcvt.s32.f32 %v1331
        %v1336 = vsel %vm943, %v1334, 0.0
        %v1337 = vadd.f32 %v1332, %v1336
        %v1338 = vrot.slane %v1337, 4
        %v1339 = vadd.f32 %v1337, %v1338
        %v1340 = vrot.slane %v1339, 2
        %v1341 = vadd.f32 %v1339, %v1340
        %v1342 = vrot.slane %v1341, 1
        %v1343 = vadd.f32 %v1341, %v1342
        %v1344 = vsel %vm943, %v1335, 0.0
        %v1345 = vadd.f32 %v1333, %v1344
        %v1346 = vrot.slane %v1345, 4
        %v1347 = vadd.f32 %v1345, %v1346
        %v1348 = vrot.slane %v1347, 2
        %v1349 = vadd.f32 %v1347, %v1348
        %v1350 = vrot.slane %v1349, 1
        %v1351 = vadd.f32 %v1349, %v1350
        %v1352 = vsub.f32 100000.0, %v1303
        %v1353 = vsub.f32 100000.0, %v1311
        %v1354 = vmax.f32 %v1352, 0.0
        %v1355 = vmax.f32 %v1353, 0.0
        %v1356 = vmul.f32 %v1354, %v1354
        %v1357 = vmul.f32 %v1355, %v1355
        %v1358 = vmul.f32 %v1320, %v1332
        %v1359 = vmul.f32 %v1321, %v1333
        %v1360 = vmul.f32 %v1322, %v1334
        %v1361 = vmul.f32 %v1323, %v1335
        %v1362 = vsel %vm943, %v1360, 0.0
        %v1363 = vadd.f32 %v1358, %v1362
        %v1364 = vrot.slane %v1363, 4
        %v1365 = vadd.f32 %v1363, %v1364
        %v1366 = vrot.slane %v1365, 2
        %v1367 = vadd.f32 %v1365, %v1366
        %v1368 = vrot.slane %v1367, 1
        %v1369 = vadd.f32 %v1367, %v1368
        %v1370 = vsel %vm943, %v1361, 0.0
        %v1371 = vadd.f32 %v1359, %v1370
        %v1372 = vrot.slane %v1371, 4
        %v1373 = vadd.f32 %v1371, %v1372
        %v1374 = vrot.slane %v1373, 2
        %v1375 = vadd.f32 %v1373, %v1374
        %v1376 = vrot.slane %v1375, 1
        %v1377 = vadd.f32 %v1375, %v1376
        %v1378 = vsub.f32 7.0, %v1343
        %v1379 = vsub.f32 7.0, %v1351
        %v1380 = vmul.f32 %v1378, %v1356
        %v1381 = vmul.f32 %v1379, %v1357
        %v1382 = vadd.f32 %v1369, %v1380
        %v1383 = vadd.f32 %v1377, %v1381
        %v1384 = vmul.f32 %v1382, %v1230
        %v1385 = vmul.f32 %v1383, %v1231
        %vm1386 = vcmask 1040384
        %v1387 = vsel %vm1386, %v1384, 0.0
        %v1388 = vsel %vm1386, %v1385, 0.0
        %v1389 = vadd.f32 %v1387, %v1388
        %1390 = vadd.xlane.f32.xlu0 %v1389
        %v1391 = vpop.xlane.xlu0 %1390
        %v1392 = vrot.slane %v1391, 4
        %v1393 = vadd.f32 %v1391, %v1392
        %v1394 = vrot.slane %v1393, 2
        %v1395 = vadd.f32 %v1393, %v1394
        %v1396 = vrot.slane %v1395, 1
        %v1397 = vadd.f32 %v1395, %v1396
        %s1398 = vtos %v1397
        %v1399 = vlaneseq
        %v1400 = vshrl.u32 %v1399, 7
        %vm1401 = vcmp.eq.s32.totalorder %v1400, 0
        %vm1402 = vcmp.eq.s32.totalorder %v1400, 1
        %vm1403 = vcmp.eq.s32.totalorder %v1400, 2
        %v1404 = vstv %s1398
        %v1405 = vsel %vm1403, %v1404, 0.0
        %v1406 = vstv %s1291
        %v1407 = vsel %vm1402, %v1406, %v1405
        %v1408 = vstv %s1261
        %v1409 = vsel %vm1401, %v1408, %v1407
        %1410 = vst [vmem:[%s356] sm:$0xff] %v1409
        %s1411 = sand.u32 %s191, 1
        %s1412 = scalar_lea.sflag [#allocation4], %s1411
        %s1413 = sand.u32 %s191, 1
        %s1414 = smul.addr %s1413, 64
        %s1415 = scalar_lea.vmem [#allocation3], %s1414
        %s1416 = sand.u32 %s217, 1
        %s1417 = scalar_lea.sflag [#allocation6], %s1416
        %s1418 = sand.u32 %s217, 1
        %s1419 = smul.addr %s1418, 8
        %s1420 = scalar_lea.vmem [#allocation5], %s1419
        // Predicated region
        $region72: #{tpu_custom_call.1} parent=66 // pred_check
          %p1421 = pneg %p201
        $region73: #{tpu_custom_call.1} parent=66 // pred_check_branch
          %1423 = sbr.rel (%p1421) target = $region75
        $region74: #{tpu_custom_call.1} parent=66 // pred_region
          %s1424 = smul.u32 2, %s26
          %s1426 = ssub.s32 1024, 1024
          %1427 = vsyncadd %s1412, %s1426
          %s1428 = smul.addr %s1424, 128
          %s1429 = scalar_lea.hbm %s7, %s1428
          %s1430 = sshll.u32 %s1415, 4
          %s1431 = int_to_ptr.vmem [resolvable:$true] %s1430
          %1436 = dma.vmem_to_hbm [thread:$0]  %s1431, 1024, %s1429, %s1412, 256, 1024, 16
        $region75: #{tpu_custom_call.1} parent=66 // pred_fallthru
          _
        // Predicated region
        $region76: #{tpu_custom_call.1} parent=66 // pred_check
          %p1437 = pneg %p227
        $region77: #{tpu_custom_call.1} parent=66 // pred_check_branch
          %1439 = sbr.rel (%p1437) target = $region79
        $region78: #{tpu_custom_call.1} parent=66 // pred_region
          %s1441 = ssub.s32 128, 128
          %1442 = vsyncadd %s1417, %s1441
          %s1443 = smul.addr %s26, 128
          %s1444 = scalar_lea.hbm %s8, %s1443
          %s1446 = sshll.u32 %s1420, 4
          %s1447 = int_to_ptr.vmem [resolvable:$true] %s1446
          %1449 = dma.vmem_to_hbm [thread:$0]  %s1447, 128, %s1444, %s1417
        $region79: #{tpu_custom_call.1} parent=66 // pred_fallthru
          _
      $region67: #{tpu_custom_call.1} parent=5 // pred_fallthru
        _
      %p1450 = scmp.le.s32.totalorder 2, %s21
      // Predicated region
      $region80: #{tpu_custom_call.1} parent=5 // pred_check
        %p1451 = pneg %p1450
      $region81: #{tpu_custom_call.1} parent=5 // pred_check_branch
        %1453 = sbr.rel (%p1451) target = $region83
      $region82: #{tpu_custom_call.1} parent=5 // pred_region
        %s1454 = ssub.s32 %s21, 2
        // Predicated region
        $region84: #{tpu_custom_call.1} parent=82 // pred_check
          %p1455 = pneg %p207
        $region85: #{tpu_custom_call.1} parent=82 // pred_check_branch
          %1457 = sbr.rel (%p1455) target = $region87
        $region86: #{tpu_custom_call.1} parent=82 // pred_region
          %s1458 = sand.u32 %s192, 1
          %s1459 = scalar_lea.sflag [#allocation4], %s1458
          %s1460 = sand.u32 %s192, 1
          %s1461 = smul.addr %s1460, 64
          %s1462 = scalar_lea.vmem [#allocation3], %s1461
          %1463 = dma.done %s1459, 1024
        $region87: #{tpu_custom_call.1} parent=82 // pred_fallthru
          _
        // Predicated region
        $region88: #{tpu_custom_call.1} parent=82 // pred_check
          %p1464 = pneg %p233
        $region89: #{tpu_custom_call.1} parent=82 // pred_check_branch
          %1466 = sbr.rel (%p1464) target = $region91
        $region90: #{tpu_custom_call.1} parent=82 // pred_region
          %s1467 = sand.u32 %s218, 1
          %s1468 = scalar_lea.sflag [#allocation6], %s1467
          %s1469 = sand.u32 %s218, 1
          %s1470 = smul.addr %s1469, 8
          %s1471 = scalar_lea.vmem [#allocation5], %s1470
          %1472 = dma.done %s1468, 128
        $region91: #{tpu_custom_call.1} parent=82 // pred_fallthru
          _
      $region83: #{tpu_custom_call.1} parent=5 // pred_fallthru
        _
    $region6: #{tpu_custom_call.1} parent=1 // loop_footer
      %s25 = sadd.s32 1, %s21
    $region7: #{tpu_custom_call.1} parent=1 // loop_footer_branch
      %20 = sbr.rel target = $region3
    $region8: #{tpu_custom_call.1} parent=1 // loop_exit
      _
    %1473 = vsyncpa [#allocation4], 1
    %s1474 = scalar_lea.sflag [#allocation4], 1
    %1475 = vsyncpa %s1474, 1
    %1476 = vsyncpa [#allocation6], 1
    %s1477 = scalar_lea.sflag [#allocation6], 1
    %1478 = vsyncpa %s1477, 1

</llo_original>
